<compile_context>
chip_gen: v5e
topology: v5e:2x2
jax: 0.10.0
libtpu: 0.0.40
codegen_flags: <defaults>
</compile_context>

<pallas_src>
import jax
import jax.numpy as jnp
from jax import lax
from jax.experimental import pallas as pl
from jax.experimental.pallas import tpu as pltpu  # noqa: F401  (TPU namespace)


# ----------------------------------------------------------------------------
# Pallas kernel: entire T-step recurrence in one program invocation.
# ----------------------------------------------------------------------------
def decoder_kernel(
    ue_ref, e_proj_ref, h0_ref,
    w_h_ref, wih_d_t_ref, bhh_n_ref,
    va_ref, wout_t_ref, bout_ref,
    out_ref, attn_ref,
):
    B, S, D = ue_ref.shape
    T = out_ref.shape[0]
    G = 3 * D

    # Loop-invariant loads / broadcasts hoisted out of the recurrence
    # (JAX does not CSE broadcast_in_dim inside the loop).
    ue = ue_ref[...]                          # (B, S, D)   Ua(e_all) + bua + ba
    e_proj = e_proj_ref[...]                  # (B, S, 3D)  e_all @ Wih_ctx^T + folded biases
    w_h = w_h_ref[...]                        # (D, 4D)     [Whh^T | Wa^T]
    bhh_n = bhh_n_ref[...]                    # (1, D)      n-gate hidden bias
    va = va_ref[...].reshape(1, 1, D)         # (1, 1, D)
    wout_t = wout_t_ref[...]                  # (D, 3)
    bout = bout_ref[...]                      # (1, 3)
    wd0 = wih_d_t_ref[0:1, :]                 # (1, 3D)  rank-1 rows for d_input
    wd1 = wih_d_t_ref[1:2, :]
    wd2 = wih_d_t_ref[2:3, :]

    def step(t, carry):
        h, d_in = carry                       # (B, D), (B, 3)

        # Single fused MXU op on the serial h path: [gh | wa_q].
        hW = jnp.dot(h, w_h, preferred_element_type=jnp.float32)   # (B, 4D)
        wa_q = hW[:, G:]                                            # (B, D); ba folded into ue

        # Bahdanau scores + softmax over S (EUP tanh/exp, XLU reduce).
        s = jnp.sum(jnp.tanh(wa_q[:, None, :] + ue) * va, axis=-1)  # (B, S)
        s = s - jnp.max(s, axis=-1, keepdims=True)
        p = jnp.exp(s)
        attn_w = p / jnp.sum(p, axis=-1, keepdims=True)             # (B, S)

        # GRU gate pre-activations (input side):
        #   context part fused via e_proj (biases already folded in);
        #   d_input part as three rank-1 VPU broadcast-mul-adds.
        pre = (jnp.sum(attn_w[:, :, None] * e_proj, axis=1)          # (B, 3D)
               + d_in[:, 0:1] * wd0 + d_in[:, 1:2] * wd1 + d_in[:, 2:3] * wd2)

        r = jax.nn.sigmoid(pre[:, :D] + hW[:, :D])
        z = jax.nn.sigmoid(pre[:, D:2 * D] + hW[:, D:2 * D])
        n = jnp.tanh(pre[:, 2 * D:G] + r * (hW[:, 2 * D:G] + bhh_n))
        h_new = (1.0 - z) * n + z * h                                # (B, D)

        # Output projection D -> 3 (also the next step's feedback input).
        y = jnp.dot(h_new, wout_t, preferred_element_type=jnp.float32) + bout  # (B, 3)

        out_ref[t] = y.astype(out_ref.dtype)
        attn_ref[t] = attn_w.astype(attn_ref.dtype)
        return (h_new, y)

    lax.fori_loop(0, T, step,
                  (h0_ref[...], jnp.zeros((B, 3), jnp.float32)),
                  unroll=True)


# ----------------------------------------------------------------------------
# Wrapper: parameter plumbing, loop-invariant precomputes, pallas_call, layout.
# ----------------------------------------------------------------------------
def decoder_block_forward(e_all, e_last, params, longest_coor):
    B, S, D = e_all.shape
    T = longest_coor
    f32 = jnp.float32

    e32 = e_all.astype(f32)
    h0 = e_last[0].astype(f32)                       # (B, D) from (1, B, D)

    wih = params["Wih"].astype(f32)                  # (3D, D+3): [context | d_input]
    wih_ctx_t = wih[:, :D].T                         # (D, 3D)
    wih_d_t = wih[:, D:].T                           # (3, 3D)

    bih = params["bih"].astype(f32)                  # (3D,)
    bhh = params["bhh"].astype(f32)                  # (3D,)

    # Exact bias folding (softmax weights sum to 1):
    #   r, z gates: bih + bhh folded into e_proj
    #   n gate    : bih folded into e_proj; bhh_n stays inside the r* term.
    bias_fold = jnp.concatenate([bih[:2 * D] + bhh[:2 * D], bih[2 * D:]])    # (3D,)

    # Loop-invariant precomputes (single XLA matmuls, hoisted out of the kernel).
    # ba is folded into ue; bva is a softmax-invariant constant shift and is dropped.
    ue = e32 @ params["Ua"].T.astype(f32) + params["bua"].astype(f32) \
        + params["ba"].astype(f32)                                           # (B, S, D)
    e_proj = e32 @ wih_ctx_t + bias_fold                                     # (B, S, 3D)
    w_h_fused = jnp.concatenate(
        [params["Whh"].T, params["Wa"].T], axis=1).astype(f32)               # (D, 4D)

    args = (
        ue.astype(f32),
        e_proj.astype(f32),
        h0,
        w_h_fused,
        wih_d_t,
        bhh[2 * D:].reshape(1, D),
        params["Va"].reshape(1, D).astype(f32),
        params["Wout"].T.astype(f32),
        params["bout"].reshape(1, 3).astype(f32),
    )

    out_shape = (
        jax.ShapeDtypeStruct((T, B, 3), f32),        # d_outputs, time-major
        jax.ShapeDtypeStruct((T, B, S), f32),        # cross_attn, time-major
    )

    # Single invocation, no grid: whole arrays resident in VMEM, one HBM flush.
    outs_tb, attn_tb = pl.pallas_call(
        decoder_kernel,
        out_shape=out_shape,
    )(*args)

    d_outputs = jnp.transpose(outs_tb, (1, 0, 2))    # (B, T, 3)
    cross_attn = jnp.transpose(attn_tb, (1, 0, 2))   # (B, T, S)
    return d_outputs, cross_attn


# ----------------------------------------------------------------------------
# Pure-JAX reference mirroring the PyTorch module (for correctness check).
# ----------------------------------------------------------------------------
def reference_forward(e_all, e_last, params, longest_coor):
    B, S, D = e_all.shape
    h = e_last[0]
    d_in = jnp.zeros((B, 3), jnp.float32)
    ue = e_all @ params["Ua"].T + params["bua"]
    outs, attns = [], []
    for _ in range(longest_coor):
        wa_q = h @ params["Wa"].T + params["ba"]
        scores = jnp.tanh(wa_q[:, None, :] + ue) @ params["Va"][0] + params["bva"][0]
        w = jax.nn.softmax(scores, axis=-1)
        context = jnp.einsum("bs,bsd->bd", w, e_all)
        x = jnp.concatenate([context, d_in], axis=-1)
        gx = x @ params["Wih"].T + params["bih"]
        gh = h @ params["Whh"].T + params["bhh"]
        r = jax.nn.sigmoid(gx[:, :D] + gh[:, :D])
        z = jax.nn.sigmoid(gx[:, D:2 * D] + gh[:, D:2 * D])
        n = jnp.tanh(gx[:, 2 * D:] + r * gh[:, 2 * D:])
        h = (1.0 - z) * n + z * h
        y = h @ params["Wout"].T + params["bout"]
        outs.append(y[:, None, :])
        attns.append(w[:, None, :])
        d_in = y
    return jnp.concatenate(outs, axis=1), jnp.concatenate(attns, axis=1)


if __name__ == "__main__":
    B, S = 2, 8
    dim_model = 32
    num_head = 4          # DP_Attention is never called in forward -> unused
    longest_coor = 4
    fe = 2                # feed_forward / norms never called in forward -> unused
    D = dim_model

    key = jax.random.PRNGKey(0)
    ks = jax.random.split(key, 16)

    def _p(k, shape, scale=0.2):
        return scale * jax.random.uniform(k, shape, jnp.float32, -1.0, 1.0)

    params = {
        "Wa": _p(ks[0], (D, D)),   "ba": _p(ks[1], (D,)),
        "Ua": _p(ks[2], (D, D)),   "bua": _p(ks[3], (D,)),
        "Va": _p(ks[4], (1, D)),   "bva": _p(ks[5], (1,)),
        "Wih": _p(ks[6], (3 * D, D + 3)), "bih": _p(ks[7], (3 * D,)),
        "Whh": _p(ks[8], (3 * D, D)),     "bhh": _p(ks[9], (3 * D,)),
        "Wout": _p(ks[10], (3, D)),       "bout": _p(ks[11], (3,)),
    }

    e_all = jax.random.normal(ks[12], (B, S, D), jnp.float32)
    e_last = jax.random.normal(ks[13], (1, B, D), jnp.float32)

    out, attn = decoder_block_forward(e_all, e_last, params, longest_coor)
    out, attn = jax.block_until_ready((out, attn))

    ref_out, ref_attn = reference_forward(e_all, e_last, params, longest_coor)

    assert out.shape == (B, longest_coor, 3)
    assert attn.shape == (B, longest_coor, S)
    assert jnp.allclose(out, ref_out, atol=2e-3, rtol=2e-3)
    assert jnp.allclose(attn, ref_attn, atol=2e-3, rtol=2e-3)
    print("KERNEL_OK")
</pallas_src>

<mosaic_0001>
module attributes {stable_mosaic.version = 11 : i64} {
  func.func @decoder_kernel(%arg0: memref<2x8x32xf32, #tpu.memory_space<vmem>>, %arg1: memref<2x8x96xf32, #tpu.memory_space<vmem>>, %arg2: memref<2x32xf32, #tpu.memory_space<vmem>>, %arg3: memref<32x128xf32, #tpu.memory_space<vmem>>, %arg4: memref<3x96xf32, #tpu.memory_space<vmem>>, %arg5: memref<1x32xf32, #tpu.memory_space<vmem>>, %arg6: memref<1x32xf32, #tpu.memory_space<vmem>>, %arg7: memref<32x3xf32, #tpu.memory_space<vmem>>, %arg8: memref<1x3xf32, #tpu.memory_space<vmem>>, %arg9: memref<4x2x3xf32, #tpu.memory_space<vmem>>, %arg10: memref<4x2x8xf32, #tpu.memory_space<vmem>>) attributes {dimension_semantics = [], scalar_prefetch = 0 : i64, scratch_operands = 0 : i64, tpu.core_type = #tpu.core_type<tc>} {
    %c0 = arith.constant 0 : index
    %c0_0 = arith.constant 0 : index
    %c0_1 = arith.constant 0 : index
    %0 = vector.load %arg0[%c0, %c0_0, %c0_1] : memref<2x8x32xf32, #tpu.memory_space<vmem>>, vector<2x8x32xf32>
    %c0_2 = arith.constant 0 : index
    %c0_3 = arith.constant 0 : index
    %c0_4 = arith.constant 0 : index
    %1 = vector.load %arg1[%c0_2, %c0_3, %c0_4] : memref<2x8x96xf32, #tpu.memory_space<vmem>>, vector<2x8x96xf32>
    %c0_5 = arith.constant 0 : index
    %c0_6 = arith.constant 0 : index
    %2 = vector.load %arg3[%c0_5, %c0_6] : memref<32x128xf32, #tpu.memory_space<vmem>>, vector<32x128xf32>
    %c0_7 = arith.constant 0 : index
    %c0_8 = arith.constant 0 : index
    %3 = vector.load %arg5[%c0_7, %c0_8] : memref<1x32xf32, #tpu.memory_space<vmem>>, vector<1x32xf32>
    %c0_9 = arith.constant 0 : index
    %c0_10 = arith.constant 0 : index
    %4 = vector.load %arg6[%c0_9, %c0_10] : memref<1x32xf32, #tpu.memory_space<vmem>>, vector<1x32xf32>
    %5 = vector.shape_cast %4 : vector<1x32xf32> to vector<1x1x32xf32>
    %c0_11 = arith.constant 0 : index
    %c0_12 = arith.constant 0 : index
    %6 = vector.load %arg7[%c0_11, %c0_12] : memref<32x3xf32, #tpu.memory_space<vmem>>, vector<32x3xf32>
    %c0_13 = arith.constant 0 : index
    %c0_14 = arith.constant 0 : index
    %7 = vector.load %arg8[%c0_13, %c0_14] : memref<1x3xf32, #tpu.memory_space<vmem>>, vector<1x3xf32>
    %c0_15 = arith.constant 0 : index
    %c0_16 = arith.constant 0 : index
    %8 = vector.load %arg4[%c0_15, %c0_16] : memref<3x96xf32, #tpu.memory_space<vmem>>, vector<1x96xf32>
    %c1 = arith.constant 1 : index
    %c0_17 = arith.constant 0 : index
    %9 = vector.load %arg4[%c1, %c0_17] : memref<3x96xf32, #tpu.memory_space<vmem>>, vector<1x96xf32>
    %c2 = arith.constant 2 : index
    %c0_18 = arith.constant 0 : index
    %10 = vector.load %arg4[%c2, %c0_18] : memref<3x96xf32, #tpu.memory_space<vmem>>, vector<1x96xf32>
    %c0_19 = arith.constant 0 : index
    %c0_20 = arith.constant 0 : index
    %11 = vector.load %arg2[%c0_19, %c0_20] : memref<2x32xf32, #tpu.memory_space<vmem>>, vector<2x32xf32>
    %cst = arith.constant 0.000000e+00 : f32
    %12 = vector.broadcast %cst : f32 to vector<2x3xf32>
    %c0_i32 = arith.constant 0 : i32
    %cst_21 = arith.constant dense<0.000000e+00> : vector<2x128xf32>
    %13 = tpu.matmul %11, %2, %cst_21 {dimension_numbers = #tpu.dot_dimension_numbers<[1], [0], [0], [1], [0, 0, 1, 1], [], []>} : vector<2x32xf32>, vector<32x128xf32>, vector<2x128xf32> -> vector<2x128xf32>
    %14 = vector.extract_strided_slice %13 {offsets = [0, 96], sizes = [2, 32], strides = [1, 1]} : vector<2x128xf32> to vector<2x32xf32>
    %15 = vector.shape_cast %14 : vector<2x32xf32> to vector<2x1x32xf32>
    %16 = vector.broadcast %15 : vector<2x1x32xf32> to vector<2x8x32xf32>
    %17 = arith.addf %16, %0 : vector<2x8x32xf32>
    %18 = math.tanh %17 : vector<2x8x32xf32>
    %19 = vector.broadcast %5 : vector<1x1x32xf32> to vector<2x8x32xf32>
    %20 = arith.mulf %18, %19 : vector<2x8x32xf32>
    %cst_22 = arith.constant dense<0.000000e+00> : vector<2x8xf32>
    %21 = vector.multi_reduction <add>, %20, %cst_22 [2] : vector<2x8x32xf32> to vector<2x8xf32>
    %cst_23 = arith.constant dense<0xFF800000> : vector<2xf32>
    %22 = vector.multi_reduction <maximumf>, %21, %cst_23 [1] : vector<2x8xf32> to vector<2xf32>
    %23 = vector.shape_cast %22 : vector<2xf32> to vector<2x1xf32>
    %24 = vector.broadcast %23 : vector<2x1xf32> to vector<2x8xf32>
    %25 = arith.subf %21, %24 : vector<2x8xf32>
    %26 = math.exp %25 : vector<2x8xf32>
    %cst_24 = arith.constant dense<0.000000e+00> : vector<2xf32>
    %27 = vector.multi_reduction <add>, %26, %cst_24 [1] : vector<2x8xf32> to vector<2xf32>
    %28 = vector.shape_cast %27 : vector<2xf32> to vector<2x1xf32>
    %29 = vector.broadcast %28 : vector<2x1xf32> to vector<2x8xf32>
    %30 = arith.divf %26, %29 : vector<2x8xf32>
    %31 = vector.shape_cast %30 : vector<2x8xf32> to vector<2x8x1xf32>
    %32 = vector.broadcast %31 : vector<2x8x1xf32> to vector<2x8x96xf32>
    %33 = arith.mulf %32, %1 : vector<2x8x96xf32>
    %cst_25 = arith.constant dense<0.000000e+00> : vector<2x96xf32>
    %34 = vector.multi_reduction <add>, %33, %cst_25 [1] : vector<2x8x96xf32> to vector<2x96xf32>
    %35 = vector.extract_strided_slice %12 {offsets = [0, 0], sizes = [2, 1], strides = [1, 1]} : vector<2x3xf32> to vector<2x1xf32>
    %36 = vector.broadcast %35 : vector<2x1xf32> to vector<2x96xf32>
    %37 = vector.broadcast %8 : vector<1x96xf32> to vector<2x96xf32>
    %38 = arith.mulf %36, %37 : vector<2x96xf32>
    %39 = arith.addf %34, %38 : vector<2x96xf32>
    %40 = vector.extract_strided_slice %12 {offsets = [0, 1], sizes = [2, 1], strides = [1, 1]} : vector<2x3xf32> to vector<2x1xf32>
    %41 = vector.broadcast %40 : vector<2x1xf32> to vector<2x96xf32>
    %42 = vector.broadcast %9 : vector<1x96xf32> to vector<2x96xf32>
    %43 = arith.mulf %41, %42 : vector<2x96xf32>
    %44 = arith.addf %39, %43 : vector<2x96xf32>
    %45 = vector.extract_strided_slice %12 {offsets = [0, 2], sizes = [2, 1], strides = [1, 1]} : vector<2x3xf32> to vector<2x1xf32>
    %46 = vector.broadcast %45 : vector<2x1xf32> to vector<2x96xf32>
    %47 = vector.broadcast %10 : vector<1x96xf32> to vector<2x96xf32>
    %48 = arith.mulf %46, %47 : vector<2x96xf32>
    %49 = arith.addf %44, %48 : vector<2x96xf32>
    %50 = vector.extract_strided_slice %49 {offsets = [0, 0], sizes = [2, 32], strides = [1, 1]} : vector<2x96xf32> to vector<2x32xf32>
    %51 = vector.extract_strided_slice %13 {offsets = [0, 0], sizes = [2, 32], strides = [1, 1]} : vector<2x128xf32> to vector<2x32xf32>
    %52 = arith.addf %50, %51 : vector<2x32xf32>
    %53 = arith.negf %52 : vector<2x32xf32>
    %54 = math.exp %53 : vector<2x32xf32>
    %cst_26 = arith.constant 1.000000e+00 : f32
    %55 = vector.broadcast %cst_26 : f32 to vector<2x32xf32>
    %56 = arith.addf %55, %54 : vector<2x32xf32>
    %57 = arith.divf %55, %56 : vector<2x32xf32>
    %58 = vector.extract_strided_slice %49 {offsets = [0, 32], sizes = [2, 32], strides = [1, 1]} : vector<2x96xf32> to vector<2x32xf32>
    %59 = vector.extract_strided_slice %13 {offsets = [0, 32], sizes = [2, 32], strides = [1, 1]} : vector<2x128xf32> to vector<2x32xf32>
    %60 = arith.addf %58, %59 : vector<2x32xf32>
    %61 = arith.negf %60 : vector<2x32xf32>
    %62 = math.exp %61 : vector<2x32xf32>
    %cst_27 = arith.constant 1.000000e+00 : f32
    %63 = vector.broadcast %cst_27 : f32 to vector<2x32xf32>
    %64 = arith.addf %63, %62 : vector<2x32xf32>
    %65 = arith.divf %63, %64 : vector<2x32xf32>
    %66 = vector.extract_strided_slice %49 {offsets = [0, 64], sizes = [2, 32], strides = [1, 1]} : vector<2x96xf32> to vector<2x32xf32>
    %67 = vector.extract_strided_slice %13 {offsets = [0, 64], sizes = [2, 32], strides = [1, 1]} : vector<2x128xf32> to vector<2x32xf32>
    %68 = vector.broadcast %3 : vector<1x32xf32> to vector<2x32xf32>
    %69 = arith.addf %67, %68 : vector<2x32xf32>
    %70 = arith.mulf %57, %69 : vector<2x32xf32>
    %71 = arith.addf %66, %70 : vector<2x32xf32>
    %72 = math.tanh %71 : vector<2x32xf32>
    %cst_28 = arith.constant 1.000000e+00 : f32
    %73 = vector.broadcast %cst_28 : f32 to vector<2x32xf32>
    %74 = arith.subf %73, %65 : vector<2x32xf32>
    %75 = arith.mulf %74, %72 : vector<2x32xf32>
    %76 = arith.mulf %65, %11 : vector<2x32xf32>
    %77 = arith.addf %75, %76 : vector<2x32xf32>
    %cst_29 = arith.constant dense<0.000000e+00> : vector<2x3xf32>
    %78 = tpu.matmul %77, %6, %cst_29 {dimension_numbers = #tpu.dot_dimension_numbers<[1], [0], [0], [1], [0, 0, 1, 1], [], []>} : vector<2x32xf32>, vector<32x3xf32>, vector<2x3xf32> -> vector<2x3xf32>
    %79 = vector.broadcast %7 : vector<1x3xf32> to vector<2x3xf32>
    %80 = arith.addf %78, %79 : vector<2x3xf32>
    %81 = arith.index_cast %c0_i32 : i32 to index
    %c0_30 = arith.constant 0 : index
    %c0_31 = arith.constant 0 : index
    %82 = vector.load %arg9[%81, %c0_30, %c0_31] : memref<4x2x3xf32, #tpu.memory_space<vmem>>, vector<1x2x3xf32>
    %83 = vector.shape_cast %82 : vector<1x2x3xf32> to vector<2x3xf32>
    %84 = vector.shape_cast %80 : vector<2x3xf32> to vector<1x2x3xf32>
    tpu.vector_store %arg9[%81, %c0_30, %c0_31], %84 {strides = array<i32>} : memref<4x2x3xf32, #tpu.memory_space<vmem>>, vector<1x2x3xf32>,
    %85 = arith.index_cast %c0_i32 : i32 to index
    %c0_32 = arith.constant 0 : index
    %c0_33 = arith.constant 0 : index
    %86 = vector.load %arg10[%85, %c0_32, %c0_33] : memref<4x2x8xf32, #tpu.memory_space<vmem>>, vector<1x2x8xf32>
    %87 = vector.shape_cast %86 : vector<1x2x8xf32> to vector<2x8xf32>
    %88 = vector.shape_cast %30 : vector<2x8xf32> to vector<1x2x8xf32>
    tpu.vector_store %arg10[%85, %c0_32, %c0_33], %88 {strides = array<i32>} : memref<4x2x8xf32, #tpu.memory_space<vmem>>, vector<1x2x8xf32>,
    %c1_i32 = arith.constant 1 : i32
    %cst_34 = arith.constant dense<0.000000e+00> : vector<2x128xf32>
    %89 = tpu.matmul %77, %2, %cst_34 {dimension_numbers = #tpu.dot_dimension_numbers<[1], [0], [0], [1], [0, 0, 1, 1], [], []>} : vector<2x32xf32>, vector<32x128xf32>, vector<2x128xf32> -> vector<2x128xf32>
    %90 = vector.extract_strided_slice %89 {offsets = [0, 96], sizes = [2, 32], strides = [1, 1]} : vector<2x128xf32> to vector<2x32xf32>
    %91 = vector.shape_cast %90 : vector<2x32xf32> to vector<2x1x32xf32>
    %92 = vector.broadcast %91 : vector<2x1x32xf32> to vector<2x8x32xf32>
    %93 = arith.addf %92, %0 : vector<2x8x32xf32>
    %94 = math.tanh %93 : vector<2x8x32xf32>
    %95 = vector.broadcast %5 : vector<1x1x32xf32> to vector<2x8x32xf32>
    %96 = arith.mulf %94, %95 : vector<2x8x32xf32>
    %cst_35 = arith.constant dense<0.000000e+00> : vector<2x8xf32>
    %97 = vector.multi_reduction <add>, %96, %cst_35 [2] : vector<2x8x32xf32> to vector<2x8xf32>
    %cst_36 = arith.constant dense<0xFF800000> : vector<2xf32>
    %98 = vector.multi_reduction <maximumf>, %97, %cst_36 [1] : vector<2x8xf32> to vector<2xf32>
    %99 = vector.shape_cast %98 : vector<2xf32> to vector<2x1xf32>
    %100 = vector.broadcast %99 : vector<2x1xf32> to vector<2x8xf32>
    %101 = arith.subf %97, %100 : vector<2x8xf32>
    %102 = math.exp %101 : vector<2x8xf32>
    %cst_37 = arith.constant dense<0.000000e+00> : vector<2xf32>
    %103 = vector.multi_reduction <add>, %102, %cst_37 [1] : vector<2x8xf32> to vector<2xf32>
    %104 = vector.shape_cast %103 : vector<2xf32> to vector<2x1xf32>
    %105 = vector.broadcast %104 : vector<2x1xf32> to vector<2x8xf32>
    %106 = arith.divf %102, %105 : vector<2x8xf32>
    %107 = vector.shape_cast %106 : vector<2x8xf32> to vector<2x8x1xf32>
    %108 = vector.broadcast %107 : vector<2x8x1xf32> to vector<2x8x96xf32>
    %109 = arith.mulf %108, %1 : vector<2x8x96xf32>
    %cst_38 = arith.constant dense<0.000000e+00> : vector<2x96xf32>
    %110 = vector.multi_reduction <add>, %109, %cst_38 [1] : vector<2x8x96xf32> to vector<2x96xf32>
    %111 = vector.extract_strided_slice %80 {offsets = [0, 0], sizes = [2, 1], strides = [1, 1]} : vector<2x3xf32> to vector<2x1xf32>
    %112 = vector.broadcast %111 : vector<2x1xf32> to vector<2x96xf32>
    %113 = vector.broadcast %8 : vector<1x96xf32> to vector<2x96xf32>
    %114 = arith.mulf %112, %113 : vector<2x96xf32>
    %115 = arith.addf %110, %114 : vector<2x96xf32>
    %116 = vector.extract_strided_slice %80 {offsets = [0, 1], sizes = [2, 1], strides = [1, 1]} : vector<2x3xf32> to vector<2x1xf32>
    %117 = vector.broadcast %116 : vector<2x1xf32> to vector<2x96xf32>
    %118 = vector.broadcast %9 : vector<1x96xf32> to vector<2x96xf32>
    %119 = arith.mulf %117, %118 : vector<2x96xf32>
    %120 = arith.addf %115, %119 : vector<2x96xf32>
    %121 = vector.extract_strided_slice %80 {offsets = [0, 2], sizes = [2, 1], strides = [1, 1]} : vector<2x3xf32> to vector<2x1xf32>
    %122 = vector.broadcast %121 : vector<2x1xf32> to vector<2x96xf32>
    %123 = vector.broadcast %10 : vector<1x96xf32> to vector<2x96xf32>
    %124 = arith.mulf %122, %123 : vector<2x96xf32>
    %125 = arith.addf %120, %124 : vector<2x96xf32>
    %126 = vector.extract_strided_slice %125 {offsets = [0, 0], sizes = [2, 32], strides = [1, 1]} : vector<2x96xf32> to vector<2x32xf32>
    %127 = vector.extract_strided_slice %89 {offsets = [0, 0], sizes = [2, 32], strides = [1, 1]} : vector<2x128xf32> to vector<2x32xf32>
    %128 = arith.addf %126, %127 : vector<2x32xf32>
    %129 = arith.negf %128 : vector<2x32xf32>
    %130 = math.exp %129 : vector<2x32xf32>
    %cst_39 = arith.constant 1.000000e+00 : f32
    %131 = vector.broadcast %cst_39 : f32 to vector<2x32xf32>
    %132 = arith.addf %131, %130 : vector<2x32xf32>
    %133 = arith.divf %131, %132 : vector<2x32xf32>
    %134 = vector.extract_strided_slice %125 {offsets = [0, 32], sizes = [2, 32], strides = [1, 1]} : vector<2x96xf32> to vector<2x32xf32>
    %135 = vector.extract_strided_slice %89 {offsets = [0, 32], sizes = [2, 32], strides = [1, 1]} : vector<2x128xf32> to vector<2x32xf32>
    %136 = arith.addf %134, %135 : vector<2x32xf32>
    %137 = arith.negf %136 : vector<2x32xf32>
    %138 = math.exp %137 : vector<2x32xf32>
    %cst_40 = arith.constant 1.000000e+00 : f32
    %139 = vector.broadcast %cst_40 : f32 to vector<2x32xf32>
    %140 = arith.addf %139, %138 : vector<2x32xf32>
    %141 = arith.divf %139, %140 : vector<2x32xf32>
    %142 = vector.extract_strided_slice %125 {offsets = [0, 64], sizes = [2, 32], strides = [1, 1]} : vector<2x96xf32> to vector<2x32xf32>
    %143 = vector.extract_strided_slice %89 {offsets = [0, 64], sizes = [2, 32], strides = [1, 1]} : vector<2x128xf32> to vector<2x32xf32>
    %144 = vector.broadcast %3 : vector<1x32xf32> to vector<2x32xf32>
    %145 = arith.addf %143, %144 : vector<2x32xf32>
    %146 = arith.mulf %133, %145 : vector<2x32xf32>
    %147 = arith.addf %142, %146 : vector<2x32xf32>
    %148 = math.tanh %147 : vector<2x32xf32>
    %cst_41 = arith.constant 1.000000e+00 : f32
    %149 = vector.broadcast %cst_41 : f32 to vector<2x32xf32>
    %150 = arith.subf %149, %141 : vector<2x32xf32>
    %151 = arith.mulf %150, %148 : vector<2x32xf32>
    %152 = arith.mulf %141, %77 : vector<2x32xf32>
    %153 = arith.addf %151, %152 : vector<2x32xf32>
    %cst_42 = arith.constant dense<0.000000e+00> : vector<2x3xf32>
    %154 = tpu.matmul %153, %6, %cst_42 {dimension_numbers = #tpu.dot_dimension_numbers<[1], [0], [0], [1], [0, 0, 1, 1], [], []>} : vector<2x32xf32>, vector<32x3xf32>, vector<2x3xf32> -> vector<2x3xf32>
    %155 = vector.broadcast %7 : vector<1x3xf32> to vector<2x3xf32>
    %156 = arith.addf %154, %155 : vector<2x3xf32>
    %157 = arith.index_cast %c1_i32 : i32 to index
    %c0_43 = arith.constant 0 : index
    %c0_44 = arith.constant 0 : index
    %158 = vector.load %arg9[%157, %c0_43, %c0_44] : memref<4x2x3xf32, #tpu.memory_space<vmem>>, vector<1x2x3xf32>
    %159 = vector.shape_cast %158 : vector<1x2x3xf32> to vector<2x3xf32>
    %160 = vector.shape_cast %156 : vector<2x3xf32> to vector<1x2x3xf32>
    tpu.vector_store %arg9[%157, %c0_43, %c0_44], %160 {strides = array<i32>} : memref<4x2x3xf32, #tpu.memory_space<vmem>>, vector<1x2x3xf32>,
    %161 = arith.index_cast %c1_i32 : i32 to index
    %c0_45 = arith.constant 0 : index
    %c0_46 = arith.constant 0 : index
    %162 = vector.load %arg10[%161, %c0_45, %c0_46] : memref<4x2x8xf32, #tpu.memory_space<vmem>>, vector<1x2x8xf32>
    %163 = vector.shape_cast %162 : vector<1x2x8xf32> to vector<2x8xf32>
    %164 = vector.shape_cast %106 : vector<2x8xf32> to vector<1x2x8xf32>
    tpu.vector_store %arg10[%161, %c0_45, %c0_46], %164 {strides = array<i32>} : memref<4x2x8xf32, #tpu.memory_space<vmem>>, vector<1x2x8xf32>,
    %c2_i32 = arith.constant 2 : i32
    %cst_47 = arith.constant dense<0.000000e+00> : vector<2x128xf32>
    %165 = tpu.matmul %153, %2, %cst_47 {dimension_numbers = #tpu.dot_dimension_numbers<[1], [0], [0], [1], [0, 0, 1, 1], [], []>} : vector<2x32xf32>, vector<32x128xf32>, vector<2x128xf32> -> vector<2x128xf32>
    %166 = vector.extract_strided_slice %165 {offsets = [0, 96], sizes = [2, 32], strides = [1, 1]} : vector<2x128xf32> to vector<2x32xf32>
    %167 = vector.shape_cast %166 : vector<2x32xf32> to vector<2x1x32xf32>
    %168 = vector.broadcast %167 : vector<2x1x32xf32> to vector<2x8x32xf32>
    %169 = arith.addf %168, %0 : vector<2x8x32xf32>
    %170 = math.tanh %169 : vector<2x8x32xf32>
    %171 = vector.broadcast %5 : vector<1x1x32xf32> to vector<2x8x32xf32>
    %172 = arith.mulf %170, %171 : vector<2x8x32xf32>
    %cst_48 = arith.constant dense<0.000000e+00> : vector<2x8xf32>
    %173 = vector.multi_reduction <add>, %172, %cst_48 [2] : vector<2x8x32xf32> to vector<2x8xf32>
    %cst_49 = arith.constant dense<0xFF800000> : vector<2xf32>
    %174 = vector.multi_reduction <maximumf>, %173, %cst_49 [1] : vector<2x8xf32> to vector<2xf32>
    %175 = vector.shape_cast %174 : vector<2xf32> to vector<2x1xf32>
    %176 = vector.broadcast %175 : vector<2x1xf32> to vector<2x8xf32>
    %177 = arith.subf %173, %176 : vector<2x8xf32>
    %178 = math.exp %177 : vector<2x8xf32>
    %cst_50 = arith.constant dense<0.000000e+00> : vector<2xf32>
    %179 = vector.multi_reduction <add>, %178, %cst_50 [1] : vector<2x8xf32> to vector<2xf32>
    %180 = vector.shape_cast %179 : vector<2xf32> to vector<2x1xf32>
    %181 = vector.broadcast %180 : vector<2x1xf32> to vector<2x8xf32>
    %182 = arith.divf %178, %181 : vector<2x8xf32>
    %183 = vector.shape_cast %182 : vector<2x8xf32> to vector<2x8x1xf32>
    %184 = vector.broadcast %183 : vector<2x8x1xf32> to vector<2x8x96xf32>
    %185 = arith.mulf %184, %1 : vector<2x8x96xf32>
    %cst_51 = arith.constant dense<0.000000e+00> : vector<2x96xf32>
    %186 = vector.multi_reduction <add>, %185, %cst_51 [1] : vector<2x8x96xf32> to vector<2x96xf32>
    %187 = vector.extract_strided_slice %156 {offsets = [0, 0], sizes = [2, 1], strides = [1, 1]} : vector<2x3xf32> to vector<2x1xf32>
    %188 = vector.broadcast %187 : vector<2x1xf32> to vector<2x96xf32>
    %189 = vector.broadcast %8 : vector<1x96xf32> to vector<2x96xf32>
    %190 = arith.mulf %188, %189 : vector<2x96xf32>
    %191 = arith.addf %186, %190 : vector<2x96xf32>
    %192 = vector.extract_strided_slice %156 {offsets = [0, 1], sizes = [2, 1], strides = [1, 1]} : vector<2x3xf32> to vector<2x1xf32>
    %193 = vector.broadcast %192 : vector<2x1xf32> to vector<2x96xf32>
    %194 = vector.broadcast %9 : vector<1x96xf32> to vector<2x96xf32>
    %195 = arith.mulf %193, %194 : vector<2x96xf32>
    %196 = arith.addf %191, %195 : vector<2x96xf32>
    %197 = vector.extract_strided_slice %156 {offsets = [0, 2], sizes = [2, 1], strides = [1, 1]} : vector<2x3xf32> to vector<2x1xf32>
    %198 = vector.broadcast %197 : vector<2x1xf32> to vector<2x96xf32>
    %199 = vector.broadcast %10 : vector<1x96xf32> to vector<2x96xf32>
    %200 = arith.mulf %198, %199 : vector<2x96xf32>
    %201 = arith.addf %196, %200 : vector<2x96xf32>
    %202 = vector.extract_strided_slice %201 {offsets = [0, 0], sizes = [2, 32], strides = [1, 1]} : vector<2x96xf32> to vector<2x32xf32>
    %203 = vector.extract_strided_slice %165 {offsets = [0, 0], sizes = [2, 32], strides = [1, 1]} : vector<2x128xf32> to vector<2x32xf32>
    %204 = arith.addf %202, %203 : vector<2x32xf32>
    %205 = arith.negf %204 : vector<2x32xf32>
    %206 = math.exp %205 : vector<2x32xf32>
    %cst_52 = arith.constant 1.000000e+00 : f32
    %207 = vector.broadcast %cst_52 : f32 to vector<2x32xf32>
    %208 = arith.addf %207, %206 : vector<2x32xf32>
    %209 = arith.divf %207, %208 : vector<2x32xf32>
    %210 = vector.extract_strided_slice %201 {offsets = [0, 32], sizes = [2, 32], strides = [1, 1]} : vector<2x96xf32> to vector<2x32xf32>
    %211 = vector.extract_strided_slice %165 {offsets = [0, 32], sizes = [2, 32], strides = [1, 1]} : vector<2x128xf32> to vector<2x32xf32>
    %212 = arith.addf %210, %211 : vector<2x32xf32>
    %213 = arith.negf %212 : vector<2x32xf32>
    %214 = math.exp %213 : vector<2x32xf32>
    %cst_53 = arith.constant 1.000000e+00 : f32
    %215 = vector.broadcast %cst_53 : f32 to vector<2x32xf32>
    %216 = arith.addf %215, %214 : vector<2x32xf32>
    %217 = arith.divf %215, %216 : vector<2x32xf32>
    %218 = vector.extract_strided_slice %201 {offsets = [0, 64], sizes = [2, 32], strides = [1, 1]} : vector<2x96xf32> to vector<2x32xf32>
    %219 = vector.extract_strided_slice %165 {offsets = [0, 64], sizes = [2, 32], strides = [1, 1]} : vector<2x128xf32> to vector<2x32xf32>
    %220 = vector.broadcast %3 : vector<1x32xf32> to vector<2x32xf32>
    %221 = arith.addf %219, %220 : vector<2x32xf32>
    %222 = arith.mulf %209, %221 : vector<2x32xf32>
    %223 = arith.addf %218, %222 : vector<2x32xf32>
    %224 = math.tanh %223 : vector<2x32xf32>
    %cst_54 = arith.constant 1.000000e+00 : f32
    %225 = vector.broadcast %cst_54 : f32 to vector<2x32xf32>
    %226 = arith.subf %225, %217 : vector<2x32xf32>
    %227 = arith.mulf %226, %224 : vector<2x32xf32>
    %228 = arith.mulf %217, %153 : vector<2x32xf32>
    %229 = arith.addf %227, %228 : vector<2x32xf32>
    %cst_55 = arith.constant dense<0.000000e+00> : vector<2x3xf32>
    %230 = tpu.matmul %229, %6, %cst_55 {dimension_numbers = #tpu.dot_dimension_numbers<[1], [0], [0], [1], [0, 0, 1, 1], [], []>} : vector<2x32xf32>, vector<32x3xf32>, vector<2x3xf32> -> vector<2x3xf32>
    %231 = vector.broadcast %7 : vector<1x3xf32> to vector<2x3xf32>
    %232 = arith.addf %230, %231 : vector<2x3xf32>
    %233 = arith.index_cast %c2_i32 : i32 to index
    %c0_56 = arith.constant 0 : index
    %c0_57 = arith.constant 0 : index
    %234 = vector.load %arg9[%233, %c0_56, %c0_57] : memref<4x2x3xf32, #tpu.memory_space<vmem>>, vector<1x2x3xf32>
    %235 = vector.shape_cast %234 : vector<1x2x3xf32> to vector<2x3xf32>
    %236 = vector.shape_cast %232 : vector<2x3xf32> to vector<1x2x3xf32>
    tpu.vector_store %arg9[%233, %c0_56, %c0_57], %236 {strides = array<i32>} : memref<4x2x3xf32, #tpu.memory_space<vmem>>, vector<1x2x3xf32>,
    %237 = arith.index_cast %c2_i32 : i32 to index
    %c0_58 = arith.constant 0 : index
    %c0_59 = arith.constant 0 : index
    %238 = vector.load %arg10[%237, %c0_58, %c0_59] : memref<4x2x8xf32, #tpu.memory_space<vmem>>, vector<1x2x8xf32>
    %239 = vector.shape_cast %238 : vector<1x2x8xf32> to vector<2x8xf32>
    %240 = vector.shape_cast %182 : vector<2x8xf32> to vector<1x2x8xf32>
    tpu.vector_store %arg10[%237, %c0_58, %c0_59], %240 {strides = array<i32>} : memref<4x2x8xf32, #tpu.memory_space<vmem>>, vector<1x2x8xf32>,
    %c3_i32 = arith.constant 3 : i32
    %cst_60 = arith.constant dense<0.000000e+00> : vector<2x128xf32>
    %241 = tpu.matmul %229, %2, %cst_60 {dimension_numbers = #tpu.dot_dimension_numbers<[1], [0], [0], [1], [0, 0, 1, 1], [], []>} : vector<2x32xf32>, vector<32x128xf32>, vector<2x128xf32> -> vector<2x128xf32>
    %242 = vector.extract_strided_slice %241 {offsets = [0, 96], sizes = [2, 32], strides = [1, 1]} : vector<2x128xf32> to vector<2x32xf32>
    %243 = vector.shape_cast %242 : vector<2x32xf32> to vector<2x1x32xf32>
    %244 = vector.broadcast %243 : vector<2x1x32xf32> to vector<2x8x32xf32>
    %245 = arith.addf %244, %0 : vector<2x8x32xf32>
    %246 = math.tanh %245 : vector<2x8x32xf32>
    %247 = vector.broadcast %5 : vector<1x1x32xf32> to vector<2x8x32xf32>
    %248 = arith.mulf %246, %247 : vector<2x8x32xf32>
    %cst_61 = arith.constant dense<0.000000e+00> : vector<2x8xf32>
    %249 = vector.multi_reduction <add>, %248, %cst_61 [2] : vector<2x8x32xf32> to vector<2x8xf32>
    %cst_62 = arith.constant dense<0xFF800000> : vector<2xf32>
    %250 = vector.multi_reduction <maximumf>, %249, %cst_62 [1] : vector<2x8xf32> to vector<2xf32>
    %251 = vector.shape_cast %250 : vector<2xf32> to vector<2x1xf32>
    %252 = vector.broadcast %251 : vector<2x1xf32> to vector<2x8xf32>
    %253 = arith.subf %249, %252 : vector<2x8xf32>
    %254 = math.exp %253 : vector<2x8xf32>
    %cst_63 = arith.constant dense<0.000000e+00> : vector<2xf32>
    %255 = vector.multi_reduction <add>, %254, %cst_63 [1] : vector<2x8xf32> to vector<2xf32>
    %256 = vector.shape_cast %255 : vector<2xf32> to vector<2x1xf32>
    %257 = vector.broadcast %256 : vector<2x1xf32> to vector<2x8xf32>
    %258 = arith.divf %254, %257 : vector<2x8xf32>
    %259 = vector.shape_cast %258 : vector<2x8xf32> to vector<2x8x1xf32>
    %260 = vector.broadcast %259 : vector<2x8x1xf32> to vector<2x8x96xf32>
    %261 = arith.mulf %260, %1 : vector<2x8x96xf32>
    %cst_64 = arith.constant dense<0.000000e+00> : vector<2x96xf32>
    %262 = vector.multi_reduction <add>, %261, %cst_64 [1] : vector<2x8x96xf32> to vector<2x96xf32>
    %263 = vector.extract_strided_slice %232 {offsets = [0, 0], sizes = [2, 1], strides = [1, 1]} : vector<2x3xf32> to vector<2x1xf32>
    %264 = vector.broadcast %263 : vector<2x1xf32> to vector<2x96xf32>
    %265 = vector.broadcast %8 : vector<1x96xf32> to vector<2x96xf32>
    %266 = arith.mulf %264, %265 : vector<2x96xf32>
    %267 = arith.addf %262, %266 : vector<2x96xf32>
    %268 = vector.extract_strided_slice %232 {offsets = [0, 1], sizes = [2, 1], strides = [1, 1]} : vector<2x3xf32> to vector<2x1xf32>
    %269 = vector.broadcast %268 : vector<2x1xf32> to vector<2x96xf32>
    %270 = vector.broadcast %9 : vector<1x96xf32> to vector<2x96xf32>
    %271 = arith.mulf %269, %270 : vector<2x96xf32>
    %272 = arith.addf %267, %271 : vector<2x96xf32>
    %273 = vector.extract_strided_slice %232 {offsets = [0, 2], sizes = [2, 1], strides = [1, 1]} : vector<2x3xf32> to vector<2x1xf32>
    %274 = vector.broadcast %273 : vector<2x1xf32> to vector<2x96xf32>
    %275 = vector.broadcast %10 : vector<1x96xf32> to vector<2x96xf32>
    %276 = arith.mulf %274, %275 : vector<2x96xf32>
    %277 = arith.addf %272, %276 : vector<2x96xf32>
    %278 = vector.extract_strided_slice %277 {offsets = [0, 0], sizes = [2, 32], strides = [1, 1]} : vector<2x96xf32> to vector<2x32xf32>
    %279 = vector.extract_strided_slice %241 {offsets = [0, 0], sizes = [2, 32], strides = [1, 1]} : vector<2x128xf32> to vector<2x32xf32>
    %280 = arith.addf %278, %279 : vector<2x32xf32>
    %281 = arith.negf %280 : vector<2x32xf32>
    %282 = math.exp %281 : vector<2x32xf32>
    %cst_65 = arith.constant 1.000000e+00 : f32
    %283 = vector.broadcast %cst_65 : f32 to vector<2x32xf32>
    %284 = arith.addf %283, %282 : vector<2x32xf32>
    %285 = arith.divf %283, %284 : vector<2x32xf32>
    %286 = vector.extract_strided_slice %277 {offsets = [0, 32], sizes = [2, 32], strides = [1, 1]} : vector<2x96xf32> to vector<2x32xf32>
    %287 = vector.extract_strided_slice %241 {offsets = [0, 32], sizes = [2, 32], strides = [1, 1]} : vector<2x128xf32> to vector<2x32xf32>
    %288 = arith.addf %286, %287 : vector<2x32xf32>
    %289 = arith.negf %288 : vector<2x32xf32>
    %290 = math.exp %289 : vector<2x32xf32>
    %cst_66 = arith.constant 1.000000e+00 : f32
    %291 = vector.broadcast %cst_66 : f32 to vector<2x32xf32>
    %292 = arith.addf %291, %290 : vector<2x32xf32>
    %293 = arith.divf %291, %292 : vector<2x32xf32>
    %294 = vector.extract_strided_slice %277 {offsets = [0, 64], sizes = [2, 32], strides = [1, 1]} : vector<2x96xf32> to vector<2x32xf32>
    %295 = vector.extract_strided_slice %241 {offsets = [0, 64], sizes = [2, 32], strides = [1, 1]} : vector<2x128xf32> to vector<2x32xf32>
    %296 = vector.broadcast %3 : vector<1x32xf32> to vector<2x32xf32>
    %297 = arith.addf %295, %296 : vector<2x32xf32>
    %298 = arith.mulf %285, %297 : vector<2x32xf32>
    %299 = arith.addf %294, %298 : vector<2x32xf32>
    %300 = math.tanh %299 : vector<2x32xf32>
    %cst_67 = arith.constant 1.000000e+00 : f32
    %301 = vector.broadcast %cst_67 : f32 to vector<2x32xf32>
    %302 = arith.subf %301, %293 : vector<2x32xf32>
    %303 = arith.mulf %302, %300 : vector<2x32xf32>
    %304 = arith.mulf %293, %229 : vector<2x32xf32>
    %305 = arith.addf %303, %304 : vector<2x32xf32>
    %cst_68 = arith.constant dense<0.000000e+00> : vector<2x3xf32>
    %306 = tpu.matmul %305, %6, %cst_68 {dimension_numbers = #tpu.dot_dimension_numbers<[1], [0], [0], [1], [0, 0, 1, 1], [], []>} : vector<2x32xf32>, vector<32x3xf32>, vector<2x3xf32> -> vector<2x3xf32>
    %307 = vector.broadcast %7 : vector<1x3xf32> to vector<2x3xf32>
    %308 = arith.addf %306, %307 : vector<2x3xf32>
    %309 = arith.index_cast %c3_i32 : i32 to index
    %c0_69 = arith.constant 0 : index
    %c0_70 = arith.constant 0 : index
    %310 = vector.load %arg9[%309, %c0_69, %c0_70] : memref<4x2x3xf32, #tpu.memory_space<vmem>>, vector<1x2x3xf32>
    %311 = vector.shape_cast %310 : vector<1x2x3xf32> to vector<2x3xf32>
    %312 = vector.shape_cast %308 : vector<2x3xf32> to vector<1x2x3xf32>
    tpu.vector_store %arg9[%309, %c0_69, %c0_70], %312 {strides = array<i32>} : memref<4x2x3xf32, #tpu.memory_space<vmem>>, vector<1x2x3xf32>,
    %313 = arith.index_cast %c3_i32 : i32 to index
    %c0_71 = arith.constant 0 : index
    %c0_72 = arith.constant 0 : index
    %314 = vector.load %arg10[%313, %c0_71, %c0_72] : memref<4x2x8xf32, #tpu.memory_space<vmem>>, vector<1x2x8xf32>
    %315 = vector.shape_cast %314 : vector<1x2x8xf32> to vector<2x8xf32>
    %316 = vector.shape_cast %258 : vector<2x8xf32> to vector<1x2x8xf32>
    tpu.vector_store %arg10[%313, %c0_71, %c0_72], %316 {strides = array<i32>} : memref<4x2x8xf32, #tpu.memory_space<vmem>>, vector<1x2x8xf32>,
    %c4_i32 = arith.constant 4 : i32
    return
  }
}

</mosaic_0001>

<llo_original>
// kernel: tpu_custom_call.1
$region0: #{tpu_custom_call.1}
  #allocation0 [shape = 'u32[]', space=smem, size = 0x4, offset = 0x4, fixed_abs, tag = 'smem constant byte address 0x4 - core index']
  #allocation1 [shape = 'u32[72,128]{1,0:T(1,128)}', space=vmem, size = 0x9000, scoped, tag = 'internal scratch']
  %s0 = inlined_call_operand.hbm [shape: f32[2,8,32], index: 0, kind: input, shape index: {}]
  %s1 = inlined_call_operand.hbm [shape: f32[2,8,96], index: 1, kind: input, shape index: {}]
  %s2 = inlined_call_operand.vmem [shape: f32[2,32], index: 2, kind: input, shape index: {}]
  %s3 = inlined_call_operand.vmem [shape: f32[32,128], index: 3, kind: input, shape index: {}]
  %s4 = inlined_call_operand.vmem [shape: f32[3,96], index: 4, kind: input, shape index: {}]
  %s5 = inlined_call_operand.hbm [shape: f32[1,32], index: 5, kind: input, shape index: {}]
  %s6 = inlined_call_operand.hbm [shape: f32[1,32], index: 6, kind: input, shape index: {}]
  %s7 = inlined_call_operand.vmem [shape: f32[32,3], index: 7, kind: input, shape index: {}]
  %s8 = inlined_call_operand.vmem [shape: f32[1,3], index: 8, kind: input, shape index: {}]
  %s9 = inlined_call_operand.vmem [shape: f32[4,2,3], index: 9, kind: output, shape index: {0}]
  %s10 = inlined_call_operand.hbm [shape: f32[4,2,8], index: 10, kind: output, shape index: {1}]
  %11 = xla_tuple %s9, %s10
  %s12 = sld [smem:[#allocation0]]
  $region70: #{tpu_custom_call.1} parent=0
    _
  %s14 = ssub.s32 1, %s12
  %s15 = scalar_select 0, %s14, %s12
  $region1: #{tpu_custom_call.1} parent=0
    #allocation2 [shape = 'u8[8192]{0}', space=vmem, size = 0x2000, scoped, tag = 'input window, operand 0, single buffered']
    #allocation3 [shape = 's32[1]{0}', space=sflag, size = 0x4, scoped, tag = 'scoped memory for tpu_custom_call.1']
    #allocation4 [shape = 's32[1]{0}', space=sflag, size = 0x4, scoped, tag = 'scoped memory for tpu_custom_call.1']
    #allocation5 [shape = 'u8[8192]{0}', space=vmem, size = 0x2000, scoped, tag = 'input window, operand 1, single buffered']
    #allocation6 [shape = 's32[1]{0}', space=sflag, size = 0x4, scoped, tag = 'scoped memory for tpu_custom_call.1']
    #allocation7 [shape = 'u8[512]{0}', space=vmem, size = 0x400, scoped, tag = 'input window, operand 5, single buffered']
    #allocation8 [shape = 'u8[512]{0}', space=vmem, size = 0x400, scoped, tag = 'input window, operand 6, single buffered']
    #allocation9 [shape = 's32[1]{0}', space=sflag, size = 0x4, scoped, tag = 'scoped memory for tpu_custom_call.1']
    #allocation10 [shape = 'u8[4096]{0}', space=vmem, size = 0x1000, scoped, tag = 'output window, operand 1, single buffered']
    %16 = vsyncpa [#allocation3], 0
    %17 = vsyncpa [#allocation6], 0
    %18 = vsyncpa [#allocation9], 0
    %19 = vsyncpa [#allocation4], 0
    // Predicated region
    $region2: #{tpu_custom_call.1} parent=1 // pred_check
      _
    $region3: #{tpu_custom_call.1} parent=1 // pred_check_branch
      %21 = sbr.rel (0) target = $region5
    $region4: #{tpu_custom_call.1} parent=1 // pred_region
      %23 = vsyncadd [#allocation3], 0
      %s24 = sshll.u32 %s0, 4
      %s25 = int_to_ptr.hbm [resolvable:$true] %s24
      %s26 = sshll.u32 [#allocation2], 4
      %s27 = int_to_ptr.vmem [resolvable:$true] %s26
      %32 = dma.hbm_to_vmem [thread:$0]  %s25, 256, %s27, [#allocation3], 128, 128, 8
    $region5: #{tpu_custom_call.1} parent=1 // pred_fallthru
      _
    // Predicated region
    $region6: #{tpu_custom_call.1} parent=1 // pred_check
      _
    $region7: #{tpu_custom_call.1} parent=1 // pred_check_branch
      %34 = sbr.rel (0) target = $region9
    $region8: #{tpu_custom_call.1} parent=1 // pred_region
      %36 = vsyncadd [#allocation6], 0
      %s37 = sshll.u32 %s1, 4
      %s38 = int_to_ptr.hbm [resolvable:$true] %s37
      %s39 = sshll.u32 [#allocation5], 4
      %s40 = int_to_ptr.vmem [resolvable:$true] %s39
      %45 = dma.hbm_to_vmem [thread:$0]  %s38, 256, %s40, [#allocation6], 128, 128, 8
    $region9: #{tpu_custom_call.1} parent=1 // pred_fallthru
      _
    // Predicated region
    $region10: #{tpu_custom_call.1} parent=1 // pred_check
      _
    $region11: #{tpu_custom_call.1} parent=1 // pred_check_branch
      %47 = sbr.rel (0) target = $region13
    $region12: #{tpu_custom_call.1} parent=1 // pred_region
      _
    $region13: #{tpu_custom_call.1} parent=1 // pred_fallthru
      _
    // Predicated region
    $region14: #{tpu_custom_call.1} parent=1 // pred_check
      _
    $region15: #{tpu_custom_call.1} parent=1 // pred_check_branch
      %49 = sbr.rel (0) target = $region17
    $region16: #{tpu_custom_call.1} parent=1 // pred_region
      _
    $region17: #{tpu_custom_call.1} parent=1 // pred_fallthru
      _
    // Predicated region
    $region18: #{tpu_custom_call.1} parent=1 // pred_check
      _
    $region19: #{tpu_custom_call.1} parent=1 // pred_check_branch
      %51 = sbr.rel (0) target = $region21
    $region20: #{tpu_custom_call.1} parent=1 // pred_region
      _
    $region21: #{tpu_custom_call.1} parent=1 // pred_fallthru
      _
    // Predicated region
    $region22: #{tpu_custom_call.1} parent=1 // pred_check
      _
    $region23: #{tpu_custom_call.1} parent=1 // pred_check_branch
      %53 = sbr.rel (0) target = $region25
    $region24: #{tpu_custom_call.1} parent=1 // pred_region
      %55 = vsyncadd [#allocation6], 0
      %s57 = sshll.u32 %s5, 4
      %s58 = int_to_ptr.hbm [resolvable:$true] %s57
      %s59 = sshll.u32 [#allocation7], 4
      %s60 = int_to_ptr.vmem [resolvable:$true] %s59
      %62 = dma.hbm_to_vmem [thread:$0]  %s58, 16, %s60, [#allocation6]
    $region25: #{tpu_custom_call.1} parent=1 // pred_fallthru
      _
    // Predicated region
    $region26: #{tpu_custom_call.1} parent=1 // pred_check
      _
    $region27: #{tpu_custom_call.1} parent=1 // pred_check_branch
      %64 = sbr.rel (0) target = $region29
    $region28: #{tpu_custom_call.1} parent=1 // pred_region
      %66 = vsyncadd [#allocation9], 0
      %s68 = sshll.u32 %s6, 4
      %s69 = int_to_ptr.hbm [resolvable:$true] %s68
      %s70 = sshll.u32 [#allocation8], 4
      %s71 = int_to_ptr.vmem [resolvable:$true] %s70
      %73 = dma.hbm_to_vmem [thread:$0]  %s69, 16, %s71, [#allocation9]
    $region29: #{tpu_custom_call.1} parent=1 // pred_fallthru
      _
    // Predicated region
    $region30: #{tpu_custom_call.1} parent=1 // pred_check
      _
    $region31: #{tpu_custom_call.1} parent=1 // pred_check_branch
      %75 = sbr.rel (0) target = $region33
    $region32: #{tpu_custom_call.1} parent=1 // pred_region
      _
    $region33: #{tpu_custom_call.1} parent=1 // pred_fallthru
      _
    // Predicated region
    $region34: #{tpu_custom_call.1} parent=1 // pred_check
      _
    $region35: #{tpu_custom_call.1} parent=1 // pred_check_branch
      %77 = sbr.rel (0) target = $region37
    $region36: #{tpu_custom_call.1} parent=1 // pred_region
      _
    $region37: #{tpu_custom_call.1} parent=1 // pred_fallthru
      _
    // Predicated region
    $region38: #{tpu_custom_call.1} parent=1 // pred_check
      _
    $region39: #{tpu_custom_call.1} parent=1 // pred_check_branch
      %79 = sbr.rel (0) target = $region41
    $region40: #{tpu_custom_call.1} parent=1 // pred_region
      %81 = dma.done [#allocation3], 256
    $region41: #{tpu_custom_call.1} parent=1 // pred_fallthru
      _
    // Predicated region
    $region42: #{tpu_custom_call.1} parent=1 // pred_check
      _
    $region43: #{tpu_custom_call.1} parent=1 // pred_check_branch
      %83 = sbr.rel (0) target = $region45
    $region44: #{tpu_custom_call.1} parent=1 // pred_region
      %85 = dma.done [#allocation6], 256
    $region45: #{tpu_custom_call.1} parent=1 // pred_fallthru
      _
    // Predicated region
    $region46: #{tpu_custom_call.1} parent=1 // pred_check
      _
    $region47: #{tpu_custom_call.1} parent=1 // pred_check_branch
      %87 = sbr.rel (0) target = $region49
    $region48: #{tpu_custom_call.1} parent=1 // pred_region
      %89 = dma.done [#allocation6], 16
    $region49: #{tpu_custom_call.1} parent=1 // pred_fallthru
      _
    // Predicated region
    $region50: #{tpu_custom_call.1} parent=1 // pred_check
      _
    $region51: #{tpu_custom_call.1} parent=1 // pred_check_branch
      %91 = sbr.rel (0) target = $region53
    $region52: #{tpu_custom_call.1} parent=1 // pred_region
      %93 = dma.done [#allocation9], 16
    $region53: #{tpu_custom_call.1} parent=1 // pred_fallthru
      _
    %v94 = vld [vmem:[#allocation2] sm:$0xff]
    %v95 = vld [vmem:[#allocation2 + $0x8] sm:$0xff]
    %v96 = vld [vmem:[#allocation5] sm:$0xff]
    %v97 = vld [vmem:[#allocation5 + $0x8] sm:$0xff]
    %v98 = vld [vmem:[%s3] sm:$0xff]
    %v99 = vld [vmem:[%s3 + $0x8] sm:$0xff]
    %v100 = vld [vmem:[%s3 + $0x10] sm:$0xff]
    %v101 = vld [vmem:[%s3 + $0x18] sm:$0xff]
    %v102 = vld [vmem:[#allocation7] sm:$0x1]
    %v103 = vld [vmem:[#allocation8] sm:$0x1]
    %v104 = vld [vmem:[%s7] sm:$0xff]
    %v105 = vld [vmem:[%s7 + $0x8] sm:$0xff]
    %v106 = vld [vmem:[%s7 + $0x10] sm:$0xff]
    %v107 = vld [vmem:[%s7 + $0x18] sm:$0xff]
    %v108 = vld [vmem:[%s8] sm:$0x1]
    %v109 = vld [vmem:[%s4] sm:$0x1]
    %v110 = vld [vmem:[%s4 + $0x1] sm:$0x1]
    %v111 = vld [vmem:[%s4 + $0x2] sm:$0x1]
    %v112 = vld [vmem:[%s2] sm:$0x3]
    %vm113 = vcmask 261120
    %v115 = vsel %vm113, %v112, 0
    %117 = vmatpush.msra.mxu0 0.0
    %118 = vmatpush.msra.mxu0 0.0
    %119 = vmatpush.msra.mxu0 0.0
    %120 = vmatpush.msra.mxu0 0.0
    %121 = vmatpush.msra.mxu0 0.0
    %122 = vmatpush.msra.mxu0 0.0
    %123 = vmatpush.msra.mxu0 0.0
    %124 = vmatpush.msra.mxu0 0.0
    %125 = vmatpush.msra.mxu0 0.0
    %126 = vmatpush.msra.mxu0 0.0
    %127 = vmatpush.msra.mxu0 0.0
    %128 = vmatpush.msra.mxu0 0.0
    %129 = vmatpush.msra.mxu0 %v101
    %130 = vmatpush.msra.mxu0 %v100
    %131 = vmatpush.msra.mxu0 %v99
    %132 = vmatpush.msra.mxu0 %v98
    %133 = vmatmul.f32.gmra.mxu0 %v115
    %v134 = vpop.f32.mrf.mxu0
    %v135 = vadd.f32 0.0, %v134
    %136 = vdwg.mxu0
    %v138 = vrot.slane %v135, 1
    %v139 = vperm.slane %v135, 0
    %v140 = vperm.slane %v138, 0
    %145 = vrot.lane.b32.xlu0 %v94, 96
    %v146 = vpop.permute.xlu0 %145
    %147 = vrot.lane.b32.xlu0 %v95, 96
    %v148 = vpop.permute.xlu0 %147
    %v151 = vadd.f32 %v139, %v146
    %v152 = vadd.f32 %v140, %v148
    %v153 = vtanh.pop %v151
    %v154 = vtanh.pop %v152
    %v156 = vperm.slane %v103, 0
    %157 = vrot.lane.b32.xlu0 %v156, 96
    %v158 = vpop.permute.xlu0 %157
    %v160 = vmul.f32 %v153, %v158
    %v161 = vmul.f32 %v154, %v158
    %164 = vrot.lane.b32.xlu0 %v160, 32
    %v165 = vpop.permute.xlu0 %164
    %166 = vrot.lane.b32.xlu0 %v161, 32
    %v167 = vpop.permute.xlu0 %166
    %v170 = vsel %vm113, %v165, 0.0
    %171 = vadd.xlane.f32.xlu0 %v170
    %v172 = vpop.xlane.xlu0 %171
    %v173 = vsel %vm113, %v167, 0.0
    %174 = vadd.xlane.f32.xlu0 %v173
    %v175 = vpop.xlane.xlu0 %174
    %v178 = vlaneseq
    %v179 = vand.u32 %v178, 127
    %v180 = vperm.slane %v172, %v179
    %v181 = vperm.slane %v175, %v179
    %vm182 = vcmask 1041409
    %v183 = vsel %vm182, %v181, %v180
    %vm185 = vcmask 58368
    %v186 = vsel %vm185, %v183, -inf
    %187 = vmax.xlane.f32.xlu0 %v186
    %v188 = vpop.xlane.xlu0 %187
    %v190 = vperm.slane %v188, 0
    %v191 = vperm.slane %v188, 1
    %v194 = vsub.f32 %v172, %v190
    %v195 = vsub.f32 %v175, %v191
    %v196 = vmul.f32 %v194, 1.442695
    %v197 = vpow.pop %v196
    %v198 = vmul.f32 %v195, 1.442695
    %v199 = vpow.pop %v198
    %202 = vset.pattern.permute.xlu0 0
    %203 = vperm.xlu0 %202, %v197
    %v204 = vpop.permute.xlu0 %203
    %205 = vset.pattern.permute.xlu0 0
    %206 = vperm.xlu0 %205, %v199
    %v207 = vpop.permute.xlu0 %206
    %v208 = vperm.slane %v204, %v179
    %v209 = vperm.slane %v207, %v179
    %v210 = vsel %vm182, %v209, %v208
    %v212 = vsel %vm185, %v210, 0.0
    %213 = vadd.xlane.f32.xlu0 %v212
    %v214 = vpop.xlane.xlu0 %213
    %v216 = vperm.slane %v214, 0
    %v217 = vperm.slane %v214, 1
    %v220 = vrcp.pop %v216
    %v221 = vmul.f32 %v216, %v220
    %v222 = vsub.f32 1.0, %v221
    %v223 = vmul.f32 %v220, %v222
    %v224 = vadd.f32 %v220, %v223
    %vm225 = vweird.f32 %v216
    %vm226 = vweird.f32 %v220
    %vm227 = vmor %vm225, %vm226
    %v228 = vsel %vm227, %v220, %v224
    %v229 = vand.u32 2147483647, %v216
    %vm230 = vcmp.eq.f32.partialorder %v229, 8.507059e+37
    %v231 = vand.u32 %v216, 2147483648
    %v232 = vor.u32 1.1754944e-38, %v231
    %v233 = vsel %vm230, %v232, %v228
    %v234 = vmul.f32 %v197, %v233
    %v235 = vrcp.pop %v217
    %v236 = vmul.f32 %v217, %v235
    %v237 = vsub.f32 1.0, %v236
    %v238 = vmul.f32 %v235, %v237
    %v239 = vadd.f32 %v235, %v238
    %vm240 = vweird.f32 %v217
    %vm241 = vweird.f32 %v235
    %vm242 = vmor %vm240, %vm241
    %v243 = vsel %vm242, %v235, %v239
    %v244 = vand.u32 2147483647, %v217
    %vm245 = vcmp.eq.f32.partialorder %v244, 8.507059e+37
    %v246 = vand.u32 %v217, 2147483648
    %v247 = vor.u32 1.1754944e-38, %v246
    %v248 = vsel %vm245, %v247, %v243
    %v249 = vmul.f32 %v199, %v248
    %251 = vset.pattern.permute.xlu0 0
    %252 = vperm.xlu0 %251, %v234
    %v253 = vpop.permute.xlu0 %252
    %256 = vset.pattern.permute.xlu0 0
    %257 = vperm.xlu0 %256, %v249
    %v258 = vpop.permute.xlu0 %257
    %v260 = vmul.f32 %v253, %v96
    %v261 = vmul.f32 %v258, %v97
    %vm262 = vcmask 785408
    %v263 = vsel %vm262, %v260, 0.0
    %v264 = vrot.slane %v263, 4
    %v265 = vadd.f32 %v263, %v264
    %v266 = vrot.slane %v265, 2
    %v267 = vadd.f32 %v265, %v266
    %v268 = vrot.slane %v267, 1
    %v269 = vadd.f32 %v267, %v268
    %v270 = vsel %vm262, %v261, 0.0
    %v271 = vrot.slane %v270, 4
    %v272 = vadd.f32 %v270, %v271
    %v273 = vrot.slane %v272, 2
    %v274 = vadd.f32 %v272, %v273
    %v275 = vrot.slane %v274, 1
    %v276 = vadd.f32 %v274, %v275
    %v277 = vperm.slane %v109, 0
    %v278 = vmul.f32 %v277, 0.0
    %v279 = vadd.f32 %v269, %v278
    %v280 = vadd.f32 %v276, %v278
    %v281 = vperm.slane %v110, 0
    %v282 = vmul.f32 %v281, 0.0
    %v283 = vadd.f32 %v279, %v282
    %v284 = vadd.f32 %v280, %v282
    %v285 = vperm.slane %v111, 0
    %v286 = vmul.f32 %v285, 0.0
    %v287 = vadd.f32 %v283, %v286
    %v288 = vadd.f32 %v284, %v286
    %v291 = vadd.f32 %v287, %v135
    %v292 = vadd.f32 %v288, %v138
    %v293 = vxor.u32 %v291, 2147483648
    %v294 = vxor.u32 %v292, 2147483648
    %v295 = vmul.f32 %v293, 1.442695
    %v296 = vpow.pop %v295
    %v297 = vmul.f32 %v294, 1.442695
    %v298 = vpow.pop %v297
    %v299 = vadd.f32 %v296, 1.0
    %v300 = vadd.f32 %v298, 1.0
    %v301 = vrcp.pop %v299
    %v302 = vmul.f32 %v299, %v301
    %v303 = vsub.f32 1.0, %v302
    %v304 = vmul.f32 %v301, %v303
    %v305 = vadd.f32 %v301, %v304
    %vm306 = vweird.f32 %v299
    %vm307 = vweird.f32 %v301
    %vm308 = vmor %vm306, %vm307
    %v309 = vsel %vm308, %v301, %v305
    %v310 = vand.u32 2147483647, %v299
    %vm311 = vcmp.eq.f32.partialorder %v310, 8.507059e+37
    %v312 = vand.u32 %v299, 2147483648
    %v313 = vor.u32 1.1754944e-38, %v312
    %v314 = vsel %vm311, %v313, %v309
    %v315 = vmul.f32 1.0, %v314
    %v316 = vrcp.pop %v300
    %v317 = vmul.f32 %v300, %v316
    %v318 = vsub.f32 1.0, %v317
    %v319 = vmul.f32 %v316, %v318
    %v320 = vadd.f32 %v316, %v319
    %vm321 = vweird.f32 %v300
    %vm322 = vweird.f32 %v316
    %vm323 = vmor %vm321, %vm322
    %v324 = vsel %vm323, %v316, %v320
    %v325 = vand.u32 2147483647, %v300
    %vm326 = vcmp.eq.f32.partialorder %v325, 8.507059e+37
    %v327 = vand.u32 %v300, 2147483648
    %v328 = vor.u32 1.1754944e-38, %v327
    %v329 = vsel %vm326, %v328, %v324
    %v330 = vmul.f32 1.0, %v329
    %v332 = vperm.slane %v102, 0
    %333 = vrot.lane.b32.xlu0 %v332, 64
    %v334 = vpop.permute.xlu0 %333
    %v336 = vadd.f32 %v135, %v334
    %v338 = vrot.slane %v336, 1
    %339 = vrot.lane.b32.xlu0 %v336, 64
    %v340 = vpop.permute.xlu0 %339
    %341 = vrot.lane.b32.xlu0 %v338, 64
    %v342 = vpop.permute.xlu0 %341
    %v345 = vmul.f32 %v315, %v340
    %v346 = vmul.f32 %v330, %v342
    %349 = vrot.lane.b32.xlu0 %v345, 64
    %v350 = vpop.permute.xlu0 %349
    %351 = vrot.lane.b32.xlu0 %v346, 64
    %v352 = vpop.permute.xlu0 %351
    %v355 = vadd.f32 %v287, %v350
    %v356 = vadd.f32 %v288, %v352
    %v357 = vtanh.pop %v355
    %v358 = vtanh.pop %v356
    %v359 = vsub.f32 1.0, %v315
    %v360 = vsub.f32 1.0, %v330
    %363 = vrot.lane.b32.xlu0 %v357, 96
    %v364 = vpop.permute.xlu0 %363
    %365 = vrot.lane.b32.xlu0 %v358, 96
    %v366 = vpop.permute.xlu0 %365
    %v369 = vmul.f32 %v359, %v364
    %v370 = vmul.f32 %v360, %v366
    %v371 = vrot.slane %v112, 1
    %372 = vrot.lane.b32.xlu0 %v112, 32
    %v373 = vpop.permute.xlu0 %372
    %374 = vrot.lane.b32.xlu0 %v371, 32
    %v375 = vpop.permute.xlu0 %374
    %v378 = vmul.f32 %v315, %v373
    %v379 = vmul.f32 %v330, %v375
    %v380 = vadd.f32 %v369, %v378
    %v381 = vadd.f32 %v370, %v379
    %v383 = vperm.slane %v108, 0
    %v387 = vrot.slane %v381, 7
    %v388 = vsel %vm182, %v387, %v380
    %389 = vrot.lane.b32.xlu0 %v388, 96
    %v390 = vpop.permute.xlu0 %389
    %v391 = vsel %vm113, %v390, 0
    %393 = vmatpush.msra.mxu0 0.0
    %394 = vmatpush.msra.mxu0 0.0
    %395 = vmatpush.msra.mxu0 0.0
    %396 = vmatpush.msra.mxu0 0.0
    %397 = vmatpush.msra.mxu0 0.0
    %398 = vmatpush.msra.mxu0 0.0
    %399 = vmatpush.msra.mxu0 0.0
    %400 = vmatpush.msra.mxu0 0.0
    %401 = vmatpush.msra.mxu0 0.0
    %402 = vmatpush.msra.mxu0 0.0
    %403 = vmatpush.msra.mxu0 0.0
    %404 = vmatpush.msra.mxu0 0.0
    %405 = vmatpush.msra.mxu0 %v107
    %406 = vmatpush.msra.mxu0 %v106
    %407 = vmatpush.msra.mxu0 %v105
    %408 = vmatpush.msra.mxu0 %v104
    %409 = vmatmul.f32.gmra.mxu0 %v391
    %v410 = vpop.f32.mrf.mxu0
    %v411 = vadd.f32 %v383, %v410
    %412 = vdwg.mxu0
    %vm413 = vcmask 17408
    %414 = vst.msk [vmem:[%s9] sm:$0x3] %vm413, %v411
    %v415 = vperm.slane %v253, %v179
    %v416 = vperm.slane %v258, %v179
    %v417 = vsel %vm182, %v416, %v415
    %419 = vst.msk [vmem:[#allocation10] sm:$0x3] %vm185, %v417
    %420 = vmatpush.msra.mxu0 0.0
    %421 = vmatpush.msra.mxu0 0.0
    %422 = vmatpush.msra.mxu0 0.0
    %423 = vmatpush.msra.mxu0 0.0
    %424 = vmatpush.msra.mxu0 0.0
    %425 = vmatpush.msra.mxu0 0.0
    %426 = vmatpush.msra.mxu0 0.0
    %427 = vmatpush.msra.mxu0 0.0
    %428 = vmatpush.msra.mxu0 0.0
    %429 = vmatpush.msra.mxu0 0.0
    %430 = vmatpush.msra.mxu0 0.0
    %431 = vmatpush.msra.mxu0 0.0
    %432 = vmatpush.msra.mxu0 %v101
    %433 = vmatpush.msra.mxu0 %v100
    %434 = vmatpush.msra.mxu0 %v99
    %435 = vmatpush.msra.mxu0 %v98
    %436 = vmatmul.f32.gmra.mxu0 %v391
    %v437 = vpop.f32.mrf.mxu0
    %v438 = vadd.f32 0.0, %v437
    %439 = vdwg.mxu0
    %v441 = vrot.slane %v438, 1
    %v442 = vperm.slane %v438, 0
    %v443 = vperm.slane %v441, 0
    %v446 = vadd.f32 %v442, %v146
    %v447 = vadd.f32 %v443, %v148
    %v448 = vtanh.pop %v446
    %v449 = vtanh.pop %v447
    %v450 = vmul.f32 %v448, %v158
    %v451 = vmul.f32 %v449, %v158
    %454 = vrot.lane.b32.xlu0 %v450, 32
    %v455 = vpop.permute.xlu0 %454
    %456 = vrot.lane.b32.xlu0 %v451, 32
    %v457 = vpop.permute.xlu0 %456
    %v460 = vsel %vm113, %v455, 0.0
    %461 = vadd.xlane.f32.xlu0 %v460
    %v462 = vpop.xlane.xlu0 %461
    %v463 = vsel %vm113, %v457, 0.0
    %464 = vadd.xlane.f32.xlu0 %v463
    %v465 = vpop.xlane.xlu0 %464
    %v468 = vperm.slane %v462, %v179
    %v469 = vperm.slane %v465, %v179
    %v470 = vsel %vm182, %v469, %v468
    %v472 = vsel %vm185, %v470, -inf
    %473 = vmax.xlane.f32.xlu0 %v472
    %v474 = vpop.xlane.xlu0 %473
    %v476 = vperm.slane %v474, 0
    %v477 = vperm.slane %v474, 1
    %v480 = vsub.f32 %v462, %v476
    %v481 = vsub.f32 %v465, %v477
    %v482 = vmul.f32 %v480, 1.442695
    %v483 = vpow.pop %v482
    %v484 = vmul.f32 %v481, 1.442695
    %v485 = vpow.pop %v484
    %488 = vset.pattern.permute.xlu0 0
    %489 = vperm.xlu0 %488, %v483
    %v490 = vpop.permute.xlu0 %489
    %491 = vset.pattern.permute.xlu0 0
    %492 = vperm.xlu0 %491, %v485
    %v493 = vpop.permute.xlu0 %492
    %v494 = vperm.slane %v490, %v179
    %v495 = vperm.slane %v493, %v179
    %v496 = vsel %vm182, %v495, %v494
    %v498 = vsel %vm185, %v496, 0.0
    %499 = vadd.xlane.f32.xlu0 %v498
    %v500 = vpop.xlane.xlu0 %499
    %v502 = vperm.slane %v500, 0
    %v503 = vperm.slane %v500, 1
    %v506 = vrcp.pop %v502
    %v507 = vmul.f32 %v502, %v506
    %v508 = vsub.f32 1.0, %v507
    %v509 = vmul.f32 %v506, %v508
    %v510 = vadd.f32 %v506, %v509
    %vm511 = vweird.f32 %v502
    %vm512 = vweird.f32 %v506
    %vm513 = vmor %vm511, %vm512
    %v514 = vsel %vm513, %v506, %v510
    %v515 = vand.u32 2147483647, %v502
    %vm516 = vcmp.eq.f32.partialorder %v515, 8.507059e+37
    %v517 = vand.u32 %v502, 2147483648
    %v518 = vor.u32 1.1754944e-38, %v517
    %v519 = vsel %vm516, %v518, %v514
    %v520 = vmul.f32 %v483, %v519
    %v521 = vrcp.pop %v503
    %v522 = vmul.f32 %v503, %v521
    %v523 = vsub.f32 1.0, %v522
    %v524 = vmul.f32 %v521, %v523
    %v525 = vadd.f32 %v521, %v524
    %vm526 = vweird.f32 %v503
    %vm527 = vweird.f32 %v521
    %vm528 = vmor %vm526, %vm527
    %v529 = vsel %vm528, %v521, %v525
    %v530 = vand.u32 2147483647, %v503
    %vm531 = vcmp.eq.f32.partialorder %v530, 8.507059e+37
    %v532 = vand.u32 %v503, 2147483648
    %v533 = vor.u32 1.1754944e-38, %v532
    %v534 = vsel %vm531, %v533, %v529
    %v535 = vmul.f32 %v485, %v534
    %537 = vset.pattern.permute.xlu0 0
    %538 = vperm.xlu0 %537, %v520
    %v539 = vpop.permute.xlu0 %538
    %542 = vset.pattern.permute.xlu0 0
    %543 = vperm.xlu0 %542, %v535
    %v544 = vpop.permute.xlu0 %543
    %v546 = vmul.f32 %v539, %v96
    %v547 = vmul.f32 %v544, %v97
    %v548 = vsel %vm262, %v546, 0.0
    %v549 = vrot.slane %v548, 4
    %v550 = vadd.f32 %v548, %v549
    %v551 = vrot.slane %v550, 2
    %v552 = vadd.f32 %v550, %v551
    %v553 = vrot.slane %v552, 1
    %v554 = vadd.f32 %v552, %v553
    %v555 = vsel %vm262, %v547, 0.0
    %v556 = vrot.slane %v555, 4
    %v557 = vadd.f32 %v555, %v556
    %v558 = vrot.slane %v557, 2
    %v559 = vadd.f32 %v557, %v558
    %v560 = vrot.slane %v559, 1
    %v561 = vadd.f32 %v559, %v560
    %563 = vset.pattern.permute.xlu0 0
    %564 = vperm.xlu0 %563, %v411
    %v565 = vpop.permute.xlu0 %564
    %v567 = vmul.f32 %v565, %v277
    %v569 = vrot.slane %v567, 1
    %v572 = vadd.f32 %v554, %v567
    %v573 = vadd.f32 %v561, %v569
    %574 = vset.pattern.permute.xlu0 1
    %575 = vperm.xlu0 %574, %v411
    %v576 = vpop.permute.xlu0 %575
    %v578 = vmul.f32 %v576, %v281
    %v580 = vrot.slane %v578, 1
    %v583 = vadd.f32 %v572, %v578
    %v584 = vadd.f32 %v573, %v580
    %585 = vset.pattern.permute.xlu0 2
    %586 = vperm.xlu0 %585, %v411
    %v587 = vpop.permute.xlu0 %586
    %v589 = vmul.f32 %v587, %v285
    %v591 = vrot.slane %v589, 1
    %v594 = vadd.f32 %v583, %v589
    %v595 = vadd.f32 %v584, %v591
    %v598 = vadd.f32 %v594, %v438
    %v599 = vadd.f32 %v595, %v441
    %v600 = vxor.u32 %v598, 2147483648
    %v601 = vxor.u32 %v599, 2147483648
    %v602 = vmul.f32 %v600, 1.442695
    %v603 = vpow.pop %v602
    %v604 = vmul.f32 %v601, 1.442695
    %v605 = vpow.pop %v604
    %v606 = vadd.f32 %v603, 1.0
    %v607 = vadd.f32 %v605, 1.0
    %v608 = vrcp.pop %v606
    %v609 = vmul.f32 %v606, %v608
    %v610 = vsub.f32 1.0, %v609
    %v611 = vmul.f32 %v608, %v610
    %v612 = vadd.f32 %v608, %v611
    %vm613 = vweird.f32 %v606
    %vm614 = vweird.f32 %v608
    %vm615 = vmor %vm613, %vm614
    %v616 = vsel %vm615, %v608, %v612
    %v617 = vand.u32 2147483647, %v606
    %vm618 = vcmp.eq.f32.partialorder %v617, 8.507059e+37
    %v619 = vand.u32 %v606, 2147483648
    %v620 = vor.u32 1.1754944e-38, %v619
    %v621 = vsel %vm618, %v620, %v616
    %v622 = vmul.f32 1.0, %v621
    %v623 = vrcp.pop %v607
    %v624 = vmul.f32 %v607, %v623
    %v625 = vsub.f32 1.0, %v624
    %v626 = vmul.f32 %v623, %v625
    %v627 = vadd.f32 %v623, %v626
    %vm628 = vweird.f32 %v607
    %vm629 = vweird.f32 %v623
    %vm630 = vmor %vm628, %vm629
    %v631 = vsel %vm630, %v623, %v627
    %v632 = vand.u32 2147483647, %v607
    %vm633 = vcmp.eq.f32.partialorder %v632, 8.507059e+37
    %v634 = vand.u32 %v607, 2147483648
    %v635 = vor.u32 1.1754944e-38, %v634
    %v636 = vsel %vm633, %v635, %v631
    %v637 = vmul.f32 1.0, %v636
    %v638 = vadd.f32 %v438, %v334
    %v640 = vrot.slane %v638, 1
    %641 = vrot.lane.b32.xlu0 %v638, 64
    %v642 = vpop.permute.xlu0 %641
    %643 = vrot.lane.b32.xlu0 %v640, 64
    %v644 = vpop.permute.xlu0 %643
    %v647 = vmul.f32 %v622, %v642
    %v648 = vmul.f32 %v637, %v644
    %651 = vrot.lane.b32.xlu0 %v647, 64
    %v652 = vpop.permute.xlu0 %651
    %653 = vrot.lane.b32.xlu0 %v648, 64
    %v654 = vpop.permute.xlu0 %653
    %v657 = vadd.f32 %v594, %v652
    %v658 = vadd.f32 %v595, %v654
    %v659 = vtanh.pop %v657
    %v660 = vtanh.pop %v658
    %v661 = vsub.f32 1.0, %v622
    %v662 = vsub.f32 1.0, %v637
    %665 = vrot.lane.b32.xlu0 %v659, 96
    %v666 = vpop.permute.xlu0 %665
    %667 = vrot.lane.b32.xlu0 %v660, 96
    %v668 = vpop.permute.xlu0 %667
    %v671 = vmul.f32 %v661, %v666
    %v672 = vmul.f32 %v662, %v668
    %v673 = vmul.f32 %v622, %v380
    %v674 = vmul.f32 %v637, %v381
    %v675 = vadd.f32 %v671, %v673
    %v676 = vadd.f32 %v672, %v674
    %v679 = vrot.slane %v676, 7
    %v680 = vsel %vm182, %v679, %v675
    %681 = vrot.lane.b32.xlu0 %v680, 96
    %v682 = vpop.permute.xlu0 %681
    %v683 = vsel %vm113, %v682, 0
    %685 = vmatpush.msra.mxu0 0.0
    %686 = vmatpush.msra.mxu0 0.0
    %687 = vmatpush.msra.mxu0 0.0
    %688 = vmatpush.msra.mxu0 0.0
    %689 = vmatpush.msra.mxu0 0.0
    %690 = vmatpush.msra.mxu0 0.0
    %691 = vmatpush.msra.mxu0 0.0
    %692 = vmatpush.msra.mxu0 0.0
    %693 = vmatpush.msra.mxu0 0.0
    %694 = vmatpush.msra.mxu0 0.0
    %695 = vmatpush.msra.mxu0 0.0
    %696 = vmatpush.msra.mxu0 0.0
    %697 = vmatpush.msra.mxu0 %v107
    %698 = vmatpush.msra.mxu0 %v106
    %699 = vmatpush.msra.mxu0 %v105
    %700 = vmatpush.msra.mxu0 %v104
    %701 = vmatmul.f32.gmra.mxu0 %v683
    %v702 = vpop.f32.mrf.mxu0
    %v703 = vadd.f32 %v383, %v702
    %704 = vdwg.mxu0
    %s705 = scalar_lea.vmem %s9, 2
    %706 = vst.msk [vmem:[%s705] sm:$0x3] %vm413, %v703
    %v707 = vperm.slane %v539, %v179
    %v708 = vperm.slane %v544, %v179
    %v709 = vsel %vm182, %v708, %v707
    %s711 = scalar_lea.vmem [#allocation10], 2
    %712 = vst.msk [vmem:[%s711] sm:$0x3] %vm185, %v709
    %713 = vmatpush.msra.mxu0 0.0
    %714 = vmatpush.msra.mxu0 0.0
    %715 = vmatpush.msra.mxu0 0.0
    %716 = vmatpush.msra.mxu0 0.0
    %717 = vmatpush.msra.mxu0 0.0
    %718 = vmatpush.msra.mxu0 0.0
    %719 = vmatpush.msra.mxu0 0.0
    %720 = vmatpush.msra.mxu0 0.0
    %721 = vmatpush.msra.mxu0 0.0
    %722 = vmatpush.msra.mxu0 0.0
    %723 = vmatpush.msra.mxu0 0.0
    %724 = vmatpush.msra.mxu0 0.0
    %725 = vmatpush.msra.mxu0 %v101
    %726 = vmatpush.msra.mxu0 %v100
    %727 = vmatpush.msra.mxu0 %v99
    %728 = vmatpush.msra.mxu0 %v98
    %729 = vmatmul.f32.gmra.mxu0 %v683
    %v730 = vpop.f32.mrf.mxu0
    %v731 = vadd.f32 0.0, %v730
    %732 = vdwg.mxu0
    %v734 = vrot.slane %v731, 1
    %v735 = vperm.slane %v731, 0
    %v736 = vperm.slane %v734, 0
    %v739 = vadd.f32 %v735, %v146
    %v740 = vadd.f32 %v736, %v148
    %v741 = vtanh.pop %v739
    %v742 = vtanh.pop %v740
    %v743 = vmul.f32 %v741, %v158
    %v744 = vmul.f32 %v742, %v158
    %747 = vrot.lane.b32.xlu0 %v743, 32
    %v748 = vpop.permute.xlu0 %747
    %749 = vrot.lane.b32.xlu0 %v744, 32
    %v750 = vpop.permute.xlu0 %749
    %v753 = vsel %vm113, %v748, 0.0
    %754 = vadd.xlane.f32.xlu0 %v753
    %v755 = vpop.xlane.xlu0 %754
    %v756 = vsel %vm113, %v750, 0.0
    %757 = vadd.xlane.f32.xlu0 %v756
    %v758 = vpop.xlane.xlu0 %757
    %v761 = vperm.slane %v755, %v179
    %v762 = vperm.slane %v758, %v179
    %v763 = vsel %vm182, %v762, %v761
    %v765 = vsel %vm185, %v763, -inf
    %766 = vmax.xlane.f32.xlu0 %v765
    %v767 = vpop.xlane.xlu0 %766
    %v769 = vperm.slane %v767, 0
    %v770 = vperm.slane %v767, 1
    %v773 = vsub.f32 %v755, %v769
    %v774 = vsub.f32 %v758, %v770
    %v775 = vmul.f32 %v773, 1.442695
    %v776 = vpow.pop %v775
    %v777 = vmul.f32 %v774, 1.442695
    %v778 = vpow.pop %v777
    %781 = vset.pattern.permute.xlu0 0
    %782 = vperm.xlu0 %781, %v776
    %v783 = vpop.permute.xlu0 %782
    %784 = vset.pattern.permute.xlu0 0
    %785 = vperm.xlu0 %784, %v778
    %v786 = vpop.permute.xlu0 %785
    %v787 = vperm.slane %v783, %v179
    %v788 = vperm.slane %v786, %v179
    %v789 = vsel %vm182, %v788, %v787
    %v791 = vsel %vm185, %v789, 0.0
    %792 = vadd.xlane.f32.xlu0 %v791
    %v793 = vpop.xlane.xlu0 %792
    %v795 = vperm.slane %v793, 0
    %v796 = vperm.slane %v793, 1
    %v799 = vrcp.pop %v795
    %v800 = vmul.f32 %v795, %v799
    %v801 = vsub.f32 1.0, %v800
    %v802 = vmul.f32 %v799, %v801
    %v803 = vadd.f32 %v799, %v802
    %vm804 = vweird.f32 %v795
    %vm805 = vweird.f32 %v799
    %vm806 = vmor %vm804, %vm805
    %v807 = vsel %vm806, %v799, %v803
    %v808 = vand.u32 2147483647, %v795
    %vm809 = vcmp.eq.f32.partialorder %v808, 8.507059e+37
    %v810 = vand.u32 %v795, 2147483648
    %v811 = vor.u32 1.1754944e-38, %v810
    %v812 = vsel %vm809, %v811, %v807
    %v813 = vmul.f32 %v776, %v812
    %v814 = vrcp.pop %v796
    %v815 = vmul.f32 %v796, %v814
    %v816 = vsub.f32 1.0, %v815
    %v817 = vmul.f32 %v814, %v816
    %v818 = vadd.f32 %v814, %v817
    %vm819 = vweird.f32 %v796
    %vm820 = vweird.f32 %v814
    %vm821 = vmor %vm819, %vm820
    %v822 = vsel %vm821, %v814, %v818
    %v823 = vand.u32 2147483647, %v796
    %vm824 = vcmp.eq.f32.partialorder %v823, 8.507059e+37
    %v825 = vand.u32 %v796, 2147483648
    %v826 = vor.u32 1.1754944e-38, %v825
    %v827 = vsel %vm824, %v826, %v822
    %v828 = vmul.f32 %v778, %v827
    %830 = vset.pattern.permute.xlu0 0
    %831 = vperm.xlu0 %830, %v813
    %v832 = vpop.permute.xlu0 %831
    %835 = vset.pattern.permute.xlu0 0
    %836 = vperm.xlu0 %835, %v828
    %v837 = vpop.permute.xlu0 %836
    %v839 = vmul.f32 %v832, %v96
    %v840 = vmul.f32 %v837, %v97
    %v841 = vsel %vm262, %v839, 0.0
    %v842 = vrot.slane %v841, 4
    %v843 = vadd.f32 %v841, %v842
    %v844 = vrot.slane %v843, 2
    %v845 = vadd.f32 %v843, %v844
    %v846 = vrot.slane %v845, 1
    %v847 = vadd.f32 %v845, %v846
    %v848 = vsel %vm262, %v840, 0.0
    %v849 = vrot.slane %v848, 4
    %v850 = vadd.f32 %v848, %v849
    %v851 = vrot.slane %v850, 2
    %v852 = vadd.f32 %v850, %v851
    %v853 = vrot.slane %v852, 1
    %v854 = vadd.f32 %v852, %v853
    %856 = vset.pattern.permute.xlu0 0
    %857 = vperm.xlu0 %856, %v703
    %v858 = vpop.permute.xlu0 %857
    %v860 = vmul.f32 %v858, %v277
    %v862 = vrot.slane %v860, 1
    %v865 = vadd.f32 %v847, %v860
    %v866 = vadd.f32 %v854, %v862
    %867 = vset.pattern.permute.xlu0 1
    %868 = vperm.xlu0 %867, %v703
    %v869 = vpop.permute.xlu0 %868
    %v871 = vmul.f32 %v869, %v281
    %v873 = vrot.slane %v871, 1
    %v876 = vadd.f32 %v865, %v871
    %v877 = vadd.f32 %v866, %v873
    %878 = vset.pattern.permute.xlu0 2
    %879 = vperm.xlu0 %878, %v703
    %v880 = vpop.permute.xlu0 %879
    %v882 = vmul.f32 %v880, %v285
    %v884 = vrot.slane %v882, 1
    %v887 = vadd.f32 %v876, %v882
    %v888 = vadd.f32 %v877, %v884
    %v891 = vadd.f32 %v887, %v731
    %v892 = vadd.f32 %v888, %v734
    %v893 = vxor.u32 %v891, 2147483648
    %v894 = vxor.u32 %v892, 2147483648
    %v895 = vmul.f32 %v893, 1.442695
    %v896 = vpow.pop %v895
    %v897 = vmul.f32 %v894, 1.442695
    %v898 = vpow.pop %v897
    %v899 = vadd.f32 %v896, 1.0
    %v900 = vadd.f32 %v898, 1.0
    %v901 = vrcp.pop %v899
    %v902 = vmul.f32 %v899, %v901
    %v903 = vsub.f32 1.0, %v902
    %v904 = vmul.f32 %v901, %v903
    %v905 = vadd.f32 %v901, %v904
    %vm906 = vweird.f32 %v899
    %vm907 = vweird.f32 %v901
    %vm908 = vmor %vm906, %vm907
    %v909 = vsel %vm908, %v901, %v905
    %v910 = vand.u32 2147483647, %v899
    %vm911 = vcmp.eq.f32.partialorder %v910, 8.507059e+37
    %v912 = vand.u32 %v899, 2147483648
    %v913 = vor.u32 1.1754944e-38, %v912
    %v914 = vsel %vm911, %v913, %v909
    %v915 = vmul.f32 1.0, %v914
    %v916 = vrcp.pop %v900
    %v917 = vmul.f32 %v900, %v916
    %v918 = vsub.f32 1.0, %v917
    %v919 = vmul.f32 %v916, %v918
    %v920 = vadd.f32 %v916, %v919
    %vm921 = vweird.f32 %v900
    %vm922 = vweird.f32 %v916
    %vm923 = vmor %vm921, %vm922
    %v924 = vsel %vm923, %v916, %v920
    %v925 = vand.u32 2147483647, %v900
    %vm926 = vcmp.eq.f32.partialorder %v925, 8.507059e+37
    %v927 = vand.u32 %v900, 2147483648
    %v928 = vor.u32 1.1754944e-38, %v927
    %v929 = vsel %vm926, %v928, %v924
    %v930 = vmul.f32 1.0, %v929
    %v931 = vadd.f32 %v731, %v334
    %v933 = vrot.slane %v931, 1
    %934 = vrot.lane.b32.xlu0 %v931, 64
    %v935 = vpop.permute.xlu0 %934
    %936 = vrot.lane.b32.xlu0 %v933, 64
    %v937 = vpop.permute.xlu0 %936
    %v940 = vmul.f32 %v915, %v935
    %v941 = vmul.f32 %v930, %v937
    %944 = vrot.lane.b32.xlu0 %v940, 64
    %v945 = vpop.permute.xlu0 %944
    %946 = vrot.lane.b32.xlu0 %v941, 64
    %v947 = vpop.permute.xlu0 %946
    %v950 = vadd.f32 %v887, %v945
    %v951 = vadd.f32 %v888, %v947
    %v952 = vtanh.pop %v950
    %v953 = vtanh.pop %v951
    %v954 = vsub.f32 1.0, %v915
    %v955 = vsub.f32 1.0, %v930
    %958 = vrot.lane.b32.xlu0 %v952, 96
    %v959 = vpop.permute.xlu0 %958
    %960 = vrot.lane.b32.xlu0 %v953, 96
    %v961 = vpop.permute.xlu0 %960
    %v964 = vmul.f32 %v954, %v959
    %v965 = vmul.f32 %v955, %v961
    %v966 = vmul.f32 %v915, %v675
    %v967 = vmul.f32 %v930, %v676
    %v968 = vadd.f32 %v964, %v966
    %v969 = vadd.f32 %v965, %v967
    %v972 = vrot.slane %v969, 7
    %v973 = vsel %vm182, %v972, %v968
    %974 = vrot.lane.b32.xlu0 %v973, 96
    %v975 = vpop.permute.xlu0 %974
    %v976 = vsel %vm113, %v975, 0
    %978 = vmatpush.msra.mxu0 0.0
    %979 = vmatpush.msra.mxu0 0.0
    %980 = vmatpush.msra.mxu0 0.0
    %981 = vmatpush.msra.mxu0 0.0
    %982 = vmatpush.msra.mxu0 0.0
    %983 = vmatpush.msra.mxu0 0.0
    %984 = vmatpush.msra.mxu0 0.0
    %985 = vmatpush.msra.mxu0 0.0
    %986 = vmatpush.msra.mxu0 0.0
    %987 = vmatpush.msra.mxu0 0.0
    %988 = vmatpush.msra.mxu0 0.0
    %989 = vmatpush.msra.mxu0 0.0
    %990 = vmatpush.msra.mxu0 %v107
    %991 = vmatpush.msra.mxu0 %v106
    %992 = vmatpush.msra.mxu0 %v105
    %993 = vmatpush.msra.mxu0 %v104
    %994 = vmatmul.f32.gmra.mxu0 %v976
    %v995 = vpop.f32.mrf.mxu0
    %v996 = vadd.f32 %v383, %v995
    %997 = vdwg.mxu0
    %s998 = scalar_lea.vmem %s9, 4
    %999 = vst.msk [vmem:[%s998] sm:$0x3] %vm413, %v996
    %v1000 = vperm.slane %v832, %v179
    %v1001 = vperm.slane %v837, %v179
    %v1002 = vsel %vm182, %v1001, %v1000
    %s1004 = scalar_lea.vmem [#allocation10], 4
    %1005 = vst.msk [vmem:[%s1004] sm:$0x3] %vm185, %v1002
    %1006 = vmatpush.msra.mxu0 0.0
    %1007 = vmatpush.msra.mxu0 0.0
    %1008 = vmatpush.msra.mxu0 0.0
    %1009 = vmatpush.msra.mxu0 0.0
    %1010 = vmatpush.msra.mxu0 0.0
    %1011 = vmatpush.msra.mxu0 0.0
    %1012 = vmatpush.msra.mxu0 0.0
    %1013 = vmatpush.msra.mxu0 0.0
    %1014 = vmatpush.msra.mxu0 0.0
    %1015 = vmatpush.msra.mxu0 0.0
    %1016 = vmatpush.msra.mxu0 0.0
    %1017 = vmatpush.msra.mxu0 0.0
    %1018 = vmatpush.msra.mxu0 %v101
    %1019 = vmatpush.msra.mxu0 %v100
    %1020 = vmatpush.msra.mxu0 %v99
    %1021 = vmatpush.msra.mxu0 %v98
    %1022 = vmatmul.f32.gmra.mxu0 %v976
    %v1023 = vpop.f32.mrf.mxu0
    %v1024 = vadd.f32 0.0, %v1023
    %1025 = vdwg.mxu0
    %v1027 = vrot.slane %v1024, 1
    %v1028 = vperm.slane %v1024, 0
    %v1029 = vperm.slane %v1027, 0
    %v1032 = vadd.f32 %v1028, %v146
    %v1033 = vadd.f32 %v1029, %v148
    %v1034 = vtanh.pop %v1032
    %v1035 = vtanh.pop %v1033
    %v1036 = vmul.f32 %v1034, %v158
    %v1037 = vmul.f32 %v1035, %v158
    %1040 = vrot.lane.b32.xlu0 %v1036, 32
    %v1041 = vpop.permute.xlu0 %1040
    %1042 = vrot.lane.b32.xlu0 %v1037, 32
    %v1043 = vpop.permute.xlu0 %1042
    %v1046 = vsel %vm113, %v1041, 0.0
    %1047 = vadd.xlane.f32.xlu0 %v1046
    %v1048 = vpop.xlane.xlu0 %1047
    %v1049 = vsel %vm113, %v1043, 0.0
    %1050 = vadd.xlane.f32.xlu0 %v1049
    %v1051 = vpop.xlane.xlu0 %1050
    %v1054 = vperm.slane %v1048, %v179
    %v1055 = vperm.slane %v1051, %v179
    %v1056 = vsel %vm182, %v1055, %v1054
    %v1058 = vsel %vm185, %v1056, -inf
    %1059 = vmax.xlane.f32.xlu0 %v1058
    %v1060 = vpop.xlane.xlu0 %1059
    %v1062 = vperm.slane %v1060, 0
    %v1063 = vperm.slane %v1060, 1
    %v1066 = vsub.f32 %v1048, %v1062
    %v1067 = vsub.f32 %v1051, %v1063
    %v1068 = vmul.f32 %v1066, 1.442695
    %v1069 = vpow.pop %v1068
    %v1070 = vmul.f32 %v1067, 1.442695
    %v1071 = vpow.pop %v1070
    %1074 = vset.pattern.permute.xlu0 0
    %1075 = vperm.xlu0 %1074, %v1069
    %v1076 = vpop.permute.xlu0 %1075
    %1077 = vset.pattern.permute.xlu0 0
    %1078 = vperm.xlu0 %1077, %v1071
    %v1079 = vpop.permute.xlu0 %1078
    %v1080 = vperm.slane %v1076, %v179
    %v1081 = vperm.slane %v1079, %v179
    %v1082 = vsel %vm182, %v1081, %v1080
    %v1084 = vsel %vm185, %v1082, 0.0
    %1085 = vadd.xlane.f32.xlu0 %v1084
    %v1086 = vpop.xlane.xlu0 %1085
    %v1088 = vperm.slane %v1086, 0
    %v1089 = vperm.slane %v1086, 1
    %v1092 = vrcp.pop %v1088
    %v1093 = vmul.f32 %v1088, %v1092
    %v1094 = vsub.f32 1.0, %v1093
    %v1095 = vmul.f32 %v1092, %v1094
    %v1096 = vadd.f32 %v1092, %v1095
    %vm1097 = vweird.f32 %v1088
    %vm1098 = vweird.f32 %v1092
    %vm1099 = vmor %vm1097, %vm1098
    %v1100 = vsel %vm1099, %v1092, %v1096
    %v1101 = vand.u32 2147483647, %v1088
    %vm1102 = vcmp.eq.f32.partialorder %v1101, 8.507059e+37
    %v1103 = vand.u32 %v1088, 2147483648
    %v1104 = vor.u32 1.1754944e-38, %v1103
    %v1105 = vsel %vm1102, %v1104, %v1100
    %v1106 = vmul.f32 %v1069, %v1105
    %v1107 = vrcp.pop %v1089
    %v1108 = vmul.f32 %v1089, %v1107
    %v1109 = vsub.f32 1.0, %v1108
    %v1110 = vmul.f32 %v1107, %v1109
    %v1111 = vadd.f32 %v1107, %v1110
    %vm1112 = vweird.f32 %v1089
    %vm1113 = vweird.f32 %v1107
    %vm1114 = vmor %vm1112, %vm1113
    %v1115 = vsel %vm1114, %v1107, %v1111
    %v1116 = vand.u32 2147483647, %v1089
    %vm1117 = vcmp.eq.f32.partialorder %v1116, 8.507059e+37
    %v1118 = vand.u32 %v1089, 2147483648
    %v1119 = vor.u32 1.1754944e-38, %v1118
    %v1120 = vsel %vm1117, %v1119, %v1115
    %v1121 = vmul.f32 %v1071, %v1120
    %1123 = vset.pattern.permute.xlu0 0
    %1124 = vperm.xlu0 %1123, %v1106
    %v1125 = vpop.permute.xlu0 %1124
    %1128 = vset.pattern.permute.xlu0 0
    %1129 = vperm.xlu0 %1128, %v1121
    %v1130 = vpop.permute.xlu0 %1129
    %v1132 = vmul.f32 %v1125, %v96
    %v1133 = vmul.f32 %v1130, %v97
    %v1134 = vsel %vm262, %v1132, 0.0
    %v1135 = vrot.slane %v1134, 4
    %v1136 = vadd.f32 %v1134, %v1135
    %v1137 = vrot.slane %v1136, 2
    %v1138 = vadd.f32 %v1136, %v1137
    %v1139 = vrot.slane %v1138, 1
    %v1140 = vadd.f32 %v1138, %v1139
    %v1141 = vsel %vm262, %v1133, 0.0
    %v1142 = vrot.slane %v1141, 4
    %v1143 = vadd.f32 %v1141, %v1142
    %v1144 = vrot.slane %v1143, 2
    %v1145 = vadd.f32 %v1143, %v1144
    %v1146 = vrot.slane %v1145, 1
    %v1147 = vadd.f32 %v1145, %v1146
    %1149 = vset.pattern.permute.xlu0 0
    %1150 = vperm.xlu0 %1149, %v996
    %v1151 = vpop.permute.xlu0 %1150
    %v1153 = vmul.f32 %v1151, %v277
    %v1155 = vrot.slane %v1153, 1
    %v1158 = vadd.f32 %v1140, %v1153
    %v1159 = vadd.f32 %v1147, %v1155
    %1160 = vset.pattern.permute.xlu0 1
    %1161 = vperm.xlu0 %1160, %v996
    %v1162 = vpop.permute.xlu0 %1161
    %v1164 = vmul.f32 %v1162, %v281
    %v1166 = vrot.slane %v1164, 1
    %v1169 = vadd.f32 %v1158, %v1164
    %v1170 = vadd.f32 %v1159, %v1166
    %1171 = vset.pattern.permute.xlu0 2
    %1172 = vperm.xlu0 %1171, %v996
    %v1173 = vpop.permute.xlu0 %1172
    %v1175 = vmul.f32 %v1173, %v285
    %v1177 = vrot.slane %v1175, 1
    %v1180 = vadd.f32 %v1169, %v1175
    %v1181 = vadd.f32 %v1170, %v1177
    %v1184 = vadd.f32 %v1180, %v1024
    %v1185 = vadd.f32 %v1181, %v1027
    %v1186 = vxor.u32 %v1184, 2147483648
    %v1187 = vxor.u32 %v1185, 2147483648
    %v1188 = vmul.f32 %v1186, 1.442695
    %v1189 = vpow.pop %v1188
    %v1190 = vmul.f32 %v1187, 1.442695
    %v1191 = vpow.pop %v1190
    %v1192 = vadd.f32 %v1189, 1.0
    %v1193 = vadd.f32 %v1191, 1.0
    %v1194 = vrcp.pop %v1192
    %v1195 = vmul.f32 %v1192, %v1194
    %v1196 = vsub.f32 1.0, %v1195
    %v1197 = vmul.f32 %v1194, %v1196
    %v1198 = vadd.f32 %v1194, %v1197
    %vm1199 = vweird.f32 %v1192
    %vm1200 = vweird.f32 %v1194
    %vm1201 = vmor %vm1199, %vm1200
    %v1202 = vsel %vm1201, %v1194, %v1198
    %v1203 = vand.u32 2147483647, %v1192
    %vm1204 = vcmp.eq.f32.partialorder %v1203, 8.507059e+37
    %v1205 = vand.u32 %v1192, 2147483648
    %v1206 = vor.u32 1.1754944e-38, %v1205
    %v1207 = vsel %vm1204, %v1206, %v1202
    %v1208 = vmul.f32 1.0, %v1207
    %v1209 = vrcp.pop %v1193
    %v1210 = vmul.f32 %v1193, %v1209
    %v1211 = vsub.f32 1.0, %v1210
    %v1212 = vmul.f32 %v1209, %v1211
    %v1213 = vadd.f32 %v1209, %v1212
    %vm1214 = vweird.f32 %v1193
    %vm1215 = vweird.f32 %v1209
    %vm1216 = vmor %vm1214, %vm1215
    %v1217 = vsel %vm1216, %v1209, %v1213
    %v1218 = vand.u32 2147483647, %v1193
    %vm1219 = vcmp.eq.f32.partialorder %v1218, 8.507059e+37
    %v1220 = vand.u32 %v1193, 2147483648
    %v1221 = vor.u32 1.1754944e-38, %v1220
    %v1222 = vsel %vm1219, %v1221, %v1217
    %v1223 = vmul.f32 1.0, %v1222
    %v1224 = vadd.f32 %v1024, %v334
    %v1226 = vrot.slane %v1224, 1
    %1227 = vrot.lane.b32.xlu0 %v1224, 64
    %v1228 = vpop.permute.xlu0 %1227
    %1229 = vrot.lane.b32.xlu0 %v1226, 64
    %v1230 = vpop.permute.xlu0 %1229
    %v1233 = vmul.f32 %v1208, %v1228
    %v1234 = vmul.f32 %v1223, %v1230
    %1237 = vrot.lane.b32.xlu0 %v1233, 64
    %v1238 = vpop.permute.xlu0 %1237
    %1239 = vrot.lane.b32.xlu0 %v1234, 64
    %v1240 = vpop.permute.xlu0 %1239
    %v1243 = vadd.f32 %v1180, %v1238
    %v1244 = vadd.f32 %v1181, %v1240
    %v1245 = vtanh.pop %v1243
    %v1246 = vtanh.pop %v1244
    %v1247 = vsub.f32 1.0, %v1208
    %v1248 = vsub.f32 1.0, %v1223
    %1251 = vrot.lane.b32.xlu0 %v1245, 96
    %v1252 = vpop.permute.xlu0 %1251
    %1253 = vrot.lane.b32.xlu0 %v1246, 96
    %v1254 = vpop.permute.xlu0 %1253
    %v1257 = vmul.f32 %v1247, %v1252
    %v1258 = vmul.f32 %v1248, %v1254
    %v1259 = vmul.f32 %v1208, %v968
    %v1260 = vmul.f32 %v1223, %v969
    %v1261 = vadd.f32 %v1257, %v1259
    %v1262 = vadd.f32 %v1258, %v1260
    %v1265 = vrot.slane %v1262, 7
    %v1266 = vsel %vm182, %v1265, %v1261
    %1267 = vrot.lane.b32.xlu0 %v1266, 96
    %v1268 = vpop.permute.xlu0 %1267
    %v1269 = vsel %vm113, %v1268, 0
    %1271 = vmatpush.msra.mxu0 0.0
    %1272 = vmatpush.msra.mxu0 0.0
    %1273 = vmatpush.msra.mxu0 0.0
    %1274 = vmatpush.msra.mxu0 0.0
    %1275 = vmatpush.msra.mxu0 0.0
    %1276 = vmatpush.msra.mxu0 0.0
    %1277 = vmatpush.msra.mxu0 0.0
    %1278 = vmatpush.msra.mxu0 0.0
    %1279 = vmatpush.msra.mxu0 0.0
    %1280 = vmatpush.msra.mxu0 0.0
    %1281 = vmatpush.msra.mxu0 0.0
    %1282 = vmatpush.msra.mxu0 0.0
    %1283 = vmatpush.msra.mxu0 %v107
    %1284 = vmatpush.msra.mxu0 %v106
    %1285 = vmatpush.msra.mxu0 %v105
    %1286 = vmatpush.msra.mxu0 %v104
    %1287 = vmatmul.f32.gmra.mxu0 %v1269
    %v1288 = vpop.f32.mrf.mxu0
    %v1289 = vadd.f32 %v383, %v1288
    %1290 = vdwg.mxu0
    %s1291 = scalar_lea.vmem %s9, 6
    %1292 = vst.msk [vmem:[%s1291] sm:$0x3] %vm413, %v1289
    %v1293 = vperm.slane %v1125, %v179
    %v1294 = vperm.slane %v1130, %v179
    %v1295 = vsel %vm182, %v1294, %v1293
    %s1297 = scalar_lea.vmem [#allocation10], 6
    %1298 = vst.msk [vmem:[%s1297] sm:$0x3] %vm185, %v1295
    // Predicated region
    $region54: #{tpu_custom_call.1} parent=1 // pred_check
      _
    $region55: #{tpu_custom_call.1} parent=1 // pred_check_branch
      %1300 = sbr.rel (0) target = $region57
    $region56: #{tpu_custom_call.1} parent=1 // pred_region
      _
    $region57: #{tpu_custom_call.1} parent=1 // pred_fallthru
      _
    // Predicated region
    $region58: #{tpu_custom_call.1} parent=1 // pred_check
      _
    $region59: #{tpu_custom_call.1} parent=1 // pred_check_branch
      %1302 = sbr.rel (0) target = $region61
    $region60: #{tpu_custom_call.1} parent=1 // pred_region
      %1304 = vsyncadd [#allocation4], 0
      %s1305 = sshll.u32 [#allocation10], 4
      %s1306 = int_to_ptr.vmem [resolvable:$true] %s1305
      %s1307 = sshll.u32 %s10, 4
      %s1308 = int_to_ptr.hbm [resolvable:$true] %s1307
      %1313 = dma.vmem_to_hbm [thread:$0]  %s1306, 128, %s1308, [#allocation4], 32, 32, 2
    $region61: #{tpu_custom_call.1} parent=1 // pred_fallthru
      _
    // Predicated region
    $region62: #{tpu_custom_call.1} parent=1 // pred_check
      _
    $region63: #{tpu_custom_call.1} parent=1 // pred_check_branch
      %1315 = sbr.rel (0) target = $region65
    $region64: #{tpu_custom_call.1} parent=1 // pred_region
      _
    $region65: #{tpu_custom_call.1} parent=1 // pred_fallthru
      _
    // Predicated region
    $region66: #{tpu_custom_call.1} parent=1 // pred_check
      _
    $region67: #{tpu_custom_call.1} parent=1 // pred_check_branch
      %1317 = sbr.rel (0) target = $region69
    $region68: #{tpu_custom_call.1} parent=1 // pred_region
      %1319 = dma.done [#allocation4], 128
    $region69: #{tpu_custom_call.1} parent=1 // pred_fallthru
      _
    %1320 = vsyncpa [#allocation3], 1
    %1321 = vsyncpa [#allocation6], 1
    %1322 = vsyncpa [#allocation9], 1
    %1323 = vsyncpa [#allocation4], 1

</llo_original>
